<compile_context>
chip_gen: v7x
topology: tpu7x:2x2x1
jax: 0.10.0
libtpu: 0.0.40
codegen_flags: <defaults>
</compile_context>

<pallas_src>
import jax
import jax.numpy as jnp
from jax.experimental import pallas as pl
from jax.experimental.pallas import tpu as pltpu

IN_DIM = 4
H1, H1_PAD = 572, 640      # pad 572 -> 640 (multiple of 128)
H2 = 256                   # already 128-aligned
OUT_DIM, OUT_PAD = 2, 128  # pad 2 -> 128 (lane-dense output stores)
MAX_TB = 1024              # cap batch tile so VMEM stays comfortably bounded


def _round_up(n, m):
    return (n + m - 1) // m * m


def _pad_to(a, shape):
    return jnp.pad(a, [(0, t - s) for s, t in zip(a.shape, shape)])


def _is_v7x():
    # v7x has 2 TensorCores per chip; elsewhere a single big tile is best.
    try:
        return "v7" in jax.devices()[0].device_kind.lower()
    except Exception:
        return False


_V7X = _is_v7x()


def dqn_mlp_kernel(x_ref, w1_ref, b1_ref, w2_ref, b2_ref, w3_ref, b3_ref, o_ref):
    x = x_ref[...]                                        # f32 (TB, 4)
    # fc1 + ReLU  (bf16 MXU operands, f32 accumulate, f32 elementwise)
    h1 = jnp.dot(x.astype(jnp.bfloat16), w1_ref[...],
                 preferred_element_type=jnp.float32)
    h1 = jnp.maximum(h1 + b1_ref[...], 0.0)
    # fc2 + ReLU
    h2 = jnp.dot(h1.astype(jnp.bfloat16), w2_ref[...],
                 preferred_element_type=jnp.float32)
    h2 = jnp.maximum(h2 + b2_ref[...], 0.0)
    # fc3 (no activation)
    o = jnp.dot(h2.astype(jnp.bfloat16), w3_ref[...],
                preferred_element_type=jnp.float32) + b3_ref[...]
    o_ref[...] = o.astype(o_ref.dtype)


def prepare_dqn_params(w1, b1, w2, b2, w3, b3):
    """Pad + cast the parameters ONCE (hoisted out of the per-step hot path).

    Zero padding is exact in bf16, so padded rows/cols contribute nothing and
    numerics match the unpadded net.  Returns bf16 weights, f32 biases.
    """
    w1p = _pad_to(w1, (IN_DIM, H1_PAD)).astype(jnp.bfloat16)
    b1p = _pad_to(b1.reshape(1, -1), (1, H1_PAD)).astype(jnp.float32)
    w2p = _pad_to(w2, (H1_PAD, H2)).astype(jnp.bfloat16)
    b2p = b2.reshape(1, -1).astype(jnp.float32)
    w3p = _pad_to(w3, (H2, OUT_PAD)).astype(jnp.bfloat16)
    b3p = _pad_to(b3.reshape(1, -1), (1, OUT_PAD)).astype(jnp.float32)
    return tuple(jax.device_put(p) for p in (w1p, b1p, w2p, b2p, w3p, b3p))


def dqn_agent_forward(x, params, *, max_block_b=MAX_TB):
    """x: (B, 4) f32; params from prepare_dqn_params -> (B, 2) f32."""
    w1p, b1p, w2p, b2p, w3p, b3p = params
    B = x.shape[0]

    # Adaptive batch tiling: one big tile by default (kernel is grid-step
    # overhead bound); split into 2 tiles on v7x at larger B so both
    # TensorCores get work under "parallel" semantics.
    n_min = 2 if (_V7X and B >= 512) else 1
    TB = min(max_block_b, _round_up(max(-(-B // n_min), 1), 8))
    Bp = _round_up(B, TB)
    n_tiles = Bp // TB
    xp = _pad_to(x.astype(jnp.float32), (Bp, IN_DIM))

    flops = 2 * Bp * (IN_DIM * H1_PAD + H1_PAD * H2 + H2 * OUT_PAD)
    bytes_accessed = (
        (w1p.size + w2p.size + w3p.size) * 2          # bf16 weights
        + (b1p.size + b2p.size + b3p.size) * 4        # f32 biases
        + xp.size * 4 + Bp * OUT_PAD * 4              # activations in/out
    )

    def run(single_buffer_weights):
        if single_buffer_weights:
            # Constant block index -> weights are DMA'd once; single buffer
            # avoids allocating a useless second copy in VMEM.
            const = lambda shape: pl.BlockSpec(
                shape, lambda i: (0,) * len(shape),
                pipeline_mode=pl.Buffered(buffer_count=1))
        else:
            const = lambda shape: pl.BlockSpec(shape, lambda i: (0,) * len(shape))

        return pl.pallas_call(
            dqn_mlp_kernel,
            out_shape=jax.ShapeDtypeStruct((Bp, OUT_PAD), jnp.float32),
            grid=(n_tiles,),
            in_specs=[
                pl.BlockSpec((TB, IN_DIM), lambda i: (i, 0)),   # x: tiled over batch
                const(w1p.shape), const(b1p.shape),             # params: resident
                const(w2p.shape), const(b2p.shape),
                const(w3p.shape), const(b3p.shape),
            ],
            out_specs=pl.BlockSpec((TB, OUT_PAD), lambda i: (i, 0)),
            compiler_params=pltpu.CompilerParams(
                dimension_semantics=("parallel",),
                vmem_limit_bytes=16 << 20,
            ),
            cost_estimate=pl.CostEstimate(
                flops=flops, transcendentals=0, bytes_accessed=bytes_accessed),
        )(xp, w1p, b1p, w2p, b2p, w3p, b3p)

    try:
        out = run(single_buffer_weights=True)
    except Exception:
        # TODO(synk): remove fallback once pl.Buffered(1) single-buffering of
        # constant-index operands is guaranteed on all deployed jax versions.
        out = run(single_buffer_weights=False)

    return out[:B, :OUT_DIM]


def init_linear_params(key, in_features, out_features):
    # Deterministic init mimicking PyTorch nn.Linear default:
    # U(-1/sqrt(in_features), 1/sqrt(in_features)) for weight and bias.
    kw, kb = jax.random.split(key)
    bound = 1.0 / jnp.sqrt(jnp.float32(in_features))
    # Stored as (in, out) for the kernel (PyTorch stores (out, in) and transposes).
    w = jax.random.uniform(kw, (in_features, out_features), jnp.float32, -bound, bound)
    b = jax.random.uniform(kb, (1, out_features), jnp.float32, -bound, bound)
    return w, b


def reference_forward(x, w1, b1, w2, b2, w3, b3):
    # Mirrors the kernel's mixed precision: bf16 MXU operands, f32 accumulate,
    # f32 bias/ReLU.
    def mm(a, w):
        return jnp.dot(a.astype(jnp.bfloat16), w.astype(jnp.bfloat16),
                       preferred_element_type=jnp.float32)
    h1 = jnp.maximum(mm(x, w1) + b1, 0.0)
    h2 = jnp.maximum(mm(h1, w2) + b2, 0.0)
    return mm(h2, w3) + b3


if __name__ == "__main__":
    key = jax.random.PRNGKey(0)
    k_x, k1, k2, k3 = jax.random.split(key, 4)

    w1, b1 = init_linear_params(k1, 4, 572)
    w2, b2 = init_linear_params(k2, 572, 256)
    w3, b3 = init_linear_params(k3, 256, 2)

    # Pad/cast ONCE (hoisted out of the per-step hot path), reuse across steps.
    params = prepare_dqn_params(w1, b1, w2, b2, w3, b3)

    # Small batches (padding / single tile) and a larger one (typical DQN batch).
    for B in (5, 8, 256):
        x = jax.random.normal(jax.random.fold_in(k_x, B), (B, 4), jnp.float32)
        out = jax.block_until_ready(dqn_agent_forward(x, params))
        ref = reference_forward(x, w1, b1, w2, b2, w3, b3)
        assert out.shape == (B, 2)
        assert jnp.allclose(out, ref, atol=1e-3, rtol=1e-3), \
            f"mismatch vs. JAX reference at B={B}"

    print("KERNEL_OK")
</pallas_src>

<mosaic_0001>
module attributes {stable_mosaic.version = 11 : i64} {
  func.func @dqn_mlp_kernel(%arg0: i32, %arg1: memref<8x4xf32, #tpu.memory_space<vmem>>, %arg2: memref<4x640xbf16, #tpu.memory_space<vmem>>, %arg3: memref<1x640xf32, #tpu.memory_space<vmem>>, %arg4: memref<640x256xbf16, #tpu.memory_space<vmem>>, %arg5: memref<1x256xf32, #tpu.memory_space<vmem>>, %arg6: memref<256x128xbf16, #tpu.memory_space<vmem>>, %arg7: memref<1x128xf32, #tpu.memory_space<vmem>>, %arg8: memref<8x128xf32, #tpu.memory_space<vmem>>) attributes {dimension_semantics = [#tpu.dimension_semantics<parallel>], iteration_bounds = array<i64: 1>, scalar_prefetch = 0 : i64, scratch_operands = 0 : i64, tpu.core_type = #tpu.core_type<tc>, window_params = [{transform_indices = @transform_0, window_bounds = array<i64: 8, 4>}, {pipeline_mode = #tpu.pipeline_mode<synchronous>, transform_indices = @transform_1, window_bounds = array<i64: 4, 640>}, {pipeline_mode = #tpu.pipeline_mode<synchronous>, transform_indices = @transform_2, window_bounds = array<i64: 1, 640>}, {pipeline_mode = #tpu.pipeline_mode<synchronous>, transform_indices = @transform_3, window_bounds = array<i64: 640, 256>}, {pipeline_mode = #tpu.pipeline_mode<synchronous>, transform_indices = @transform_4, window_bounds = array<i64: 1, 256>}, {pipeline_mode = #tpu.pipeline_mode<synchronous>, transform_indices = @transform_5, window_bounds = array<i64: 256, 128>}, {pipeline_mode = #tpu.pipeline_mode<synchronous>, transform_indices = @transform_6, window_bounds = array<i64: 1, 128>}, {transform_indices = @transform_7, window_bounds = array<i64: 8, 128>}]} {
    %c0 = arith.constant 0 : index
    %c0_0 = arith.constant 0 : index
    %0 = vector.load %arg1[%c0, %c0_0] : memref<8x4xf32, #tpu.memory_space<vmem>>, vector<8x4xf32>
    %1 = arith.truncf %0 : vector<8x4xf32> to vector<8x4xbf16>
    %c0_1 = arith.constant 0 : index
    %c0_2 = arith.constant 0 : index
    %2 = vector.load %arg2[%c0_1, %c0_2] : memref<4x640xbf16, #tpu.memory_space<vmem>>, vector<4x640xbf16>
    %cst = arith.constant dense<0.000000e+00> : vector<8x640xf32>
    %3 = tpu.matmul %1, %2, %cst {dimension_numbers = #tpu.dot_dimension_numbers<[1], [0], [0], [1], [0, 0, 1, 1], [], []>} : vector<8x4xbf16>, vector<4x640xbf16>, vector<8x640xf32> -> vector<8x640xf32>
    %c0_3 = arith.constant 0 : index
    %c0_4 = arith.constant 0 : index
    %4 = vector.load %arg3[%c0_3, %c0_4] : memref<1x640xf32, #tpu.memory_space<vmem>>, vector<1x640xf32>
    %5 = vector.broadcast %4 : vector<1x640xf32> to vector<8x640xf32>
    %6 = arith.addf %3, %5 : vector<8x640xf32>
    %cst_5 = arith.constant 0.000000e+00 : f32
    %7 = vector.broadcast %cst_5 : f32 to vector<8x640xf32>
    %8 = arith.maximumf %6, %7 : vector<8x640xf32>
    %9 = arith.truncf %8 : vector<8x640xf32> to vector<8x640xbf16>
    %c0_6 = arith.constant 0 : index
    %c0_7 = arith.constant 0 : index
    %10 = vector.load %arg4[%c0_6, %c0_7] : memref<640x256xbf16, #tpu.memory_space<vmem>>, vector<640x256xbf16>
    %cst_8 = arith.constant dense<0.000000e+00> : vector<8x256xf32>
    %11 = tpu.matmul %9, %10, %cst_8 {dimension_numbers = #tpu.dot_dimension_numbers<[1], [0], [0], [1], [0, 0, 1, 1], [], []>} : vector<8x640xbf16>, vector<640x256xbf16>, vector<8x256xf32> -> vector<8x256xf32>
    %c0_9 = arith.constant 0 : index
    %c0_10 = arith.constant 0 : index
    %12 = vector.load %arg5[%c0_9, %c0_10] : memref<1x256xf32, #tpu.memory_space<vmem>>, vector<1x256xf32>
    %13 = vector.broadcast %12 : vector<1x256xf32> to vector<8x256xf32>
    %14 = arith.addf %11, %13 : vector<8x256xf32>
    %cst_11 = arith.constant 0.000000e+00 : f32
    %15 = vector.broadcast %cst_11 : f32 to vector<8x256xf32>
    %16 = arith.maximumf %14, %15 : vector<8x256xf32>
    %17 = arith.truncf %16 : vector<8x256xf32> to vector<8x256xbf16>
    %c0_12 = arith.constant 0 : index
    %c0_13 = arith.constant 0 : index
    %18 = vector.load %arg6[%c0_12, %c0_13] : memref<256x128xbf16, #tpu.memory_space<vmem>>, vector<256x128xbf16>
    %cst_14 = arith.constant dense<0.000000e+00> : vector<8x128xf32>
    %19 = tpu.matmul %17, %18, %cst_14 {dimension_numbers = #tpu.dot_dimension_numbers<[1], [0], [0], [1], [0, 0, 1, 1], [], []>} : vector<8x256xbf16>, vector<256x128xbf16>, vector<8x128xf32> -> vector<8x128xf32>
    %c0_15 = arith.constant 0 : index
    %c0_16 = arith.constant 0 : index
    %20 = vector.load %arg7[%c0_15, %c0_16] : memref<1x128xf32, #tpu.memory_space<vmem>>, vector<1x128xf32>
    %21 = vector.broadcast %20 : vector<1x128xf32> to vector<8x128xf32>
    %22 = arith.addf %19, %21 : vector<8x128xf32>
    %c0_17 = arith.constant 0 : index
    %c0_18 = arith.constant 0 : index
    %23 = vector.load %arg8[%c0_17, %c0_18] : memref<8x128xf32, #tpu.memory_space<vmem>>, vector<8x128xf32>
    tpu.vector_store %arg8[%c0_17, %c0_18], %22 {strides = array<i32>} : memref<8x128xf32, #tpu.memory_space<vmem>>, vector<8x128xf32>,
    return
  }
  func.func @transform_0(%arg0: i32) -> (i32, i32) {
    %c0_i32 = arith.constant 0 : i32
    %c0_i32_0 = arith.constant 0 : i32
    return %arg0, %c0_i32 : i32, i32
  }
  func.func @transform_1(%arg0: i32) -> (i32, i32) {
    %c0_i32 = arith.constant 0 : i32
    %c0_i32_0 = arith.constant 0 : i32
    %c0_i32_1 = arith.constant 0 : i32
    return %c0_i32, %c0_i32_0 : i32, i32
  }
  func.func @transform_2(%arg0: i32) -> (i32, i32) {
    %c0_i32 = arith.constant 0 : i32
    %c0_i32_0 = arith.constant 0 : i32
    %c0_i32_1 = arith.constant 0 : i32
    return %c0_i32, %c0_i32_0 : i32, i32
  }
  func.func @transform_3(%arg0: i32) -> (i32, i32) {
    %c0_i32 = arith.constant 0 : i32
    %c0_i32_0 = arith.constant 0 : i32
    %c0_i32_1 = arith.constant 0 : i32
    return %c0_i32, %c0_i32_0 : i32, i32
  }
  func.func @transform_4(%arg0: i32) -> (i32, i32) {
    %c0_i32 = arith.constant 0 : i32
    %c0_i32_0 = arith.constant 0 : i32
    %c0_i32_1 = arith.constant 0 : i32
    return %c0_i32, %c0_i32_0 : i32, i32
  }
  func.func @transform_5(%arg0: i32) -> (i32, i32) {
    %c0_i32 = arith.constant 0 : i32
    %c0_i32_0 = arith.constant 0 : i32
    %c0_i32_1 = arith.constant 0 : i32
    return %c0_i32, %c0_i32_0 : i32, i32
  }
  func.func @transform_6(%arg0: i32) -> (i32, i32) {
    %c0_i32 = arith.constant 0 : i32
    %c0_i32_0 = arith.constant 0 : i32
    %c0_i32_1 = arith.constant 0 : i32
    return %c0_i32, %c0_i32_0 : i32, i32
  }
  func.func @transform_7(%arg0: i32) -> (i32, i32) {
    %c0_i32 = arith.constant 0 : i32
    %c0_i32_0 = arith.constant 0 : i32
    return %arg0, %c0_i32 : i32, i32
  }
}

module attributes {stable_mosaic.version = 11 : i64} {
  func.func @dqn_mlp_kernel(%arg0: i32, %arg1: memref<8x4xf32, #tpu.memory_space<vmem>>, %arg2: memref<4x640xbf16, #tpu.memory_space<vmem>>, %arg3: memref<1x640xf32, #tpu.memory_space<vmem>>, %arg4: memref<640x256xbf16, #tpu.memory_space<vmem>>, %arg5: memref<1x256xf32, #tpu.memory_space<vmem>>, %arg6: memref<256x128xbf16, #tpu.memory_space<vmem>>, %arg7: memref<1x128xf32, #tpu.memory_space<vmem>>, %arg8: memref<8x128xf32, #tpu.memory_space<vmem>>) attributes {dimension_semantics = [#tpu.dimension_semantics<parallel>], iteration_bounds = array<i64: 1>, scalar_prefetch = 0 : i64, scratch_operands = 0 : i64, tpu.core_type = #tpu.core_type<tc>, window_params = [{transform_indices = @transform_0, window_bounds = array<i64: 8, 4>}, {pipeline_mode = #tpu.pipeline_mode<synchronous>, transform_indices = @transform_1, window_bounds = array<i64: 4, 640>}, {pipeline_mode = #tpu.pipeline_mode<synchronous>, transform_indices = @transform_2, window_bounds = array<i64: 1, 640>}, {pipeline_mode = #tpu.pipeline_mode<synchronous>, transform_indices = @transform_3, window_bounds = array<i64: 640, 256>}, {pipeline_mode = #tpu.pipeline_mode<synchronous>, transform_indices = @transform_4, window_bounds = array<i64: 1, 256>}, {pipeline_mode = #tpu.pipeline_mode<synchronous>, transform_indices = @transform_5, window_bounds = array<i64: 256, 128>}, {pipeline_mode = #tpu.pipeline_mode<synchronous>, transform_indices = @transform_6, window_bounds = array<i64: 1, 128>}, {transform_indices = @transform_7, window_bounds = array<i64: 8, 128>}]} {
    %c0 = arith.constant 0 : index
    %c0_0 = arith.constant 0 : index
    %0 = vector.load %arg1[%c0, %c0_0] : memref<8x4xf32, #tpu.memory_space<vmem>>, vector<8x4xf32>
    %1 = arith.truncf %0 : vector<8x4xf32> to vector<8x4xbf16>
    %c0_1 = arith.constant 0 : index
    %c0_2 = arith.constant 0 : index
    %2 = vector.load %arg2[%c0_1, %c0_2] : memref<4x640xbf16, #tpu.memory_space<vmem>>, vector<4x640xbf16>
    %cst = arith.constant dense<0.000000e+00> : vector<8x640xf32>
    %3 = tpu.matmul %1, %2, %cst {dimension_numbers = #tpu.dot_dimension_numbers<[1], [0], [0], [1], [0, 0, 1, 1], [], []>} : vector<8x4xbf16>, vector<4x640xbf16>, vector<8x640xf32> -> vector<8x640xf32>
    %c0_3 = arith.constant 0 : index
    %c0_4 = arith.constant 0 : index
    %4 = vector.load %arg3[%c0_3, %c0_4] : memref<1x640xf32, #tpu.memory_space<vmem>>, vector<1x640xf32>
    %5 = vector.broadcast %4 : vector<1x640xf32> to vector<8x640xf32>
    %6 = arith.addf %3, %5 : vector<8x640xf32>
    %cst_5 = arith.constant 0.000000e+00 : f32
    %7 = vector.broadcast %cst_5 : f32 to vector<8x640xf32>
    %8 = arith.maximumf %6, %7 : vector<8x640xf32>
    %9 = arith.truncf %8 : vector<8x640xf32> to vector<8x640xbf16>
    %c0_6 = arith.constant 0 : index
    %c0_7 = arith.constant 0 : index
    %10 = vector.load %arg4[%c0_6, %c0_7] : memref<640x256xbf16, #tpu.memory_space<vmem>>, vector<640x256xbf16>
    %cst_8 = arith.constant dense<0.000000e+00> : vector<8x256xf32>
    %11 = tpu.matmul %9, %10, %cst_8 {dimension_numbers = #tpu.dot_dimension_numbers<[1], [0], [0], [1], [0, 0, 1, 1], [], []>} : vector<8x640xbf16>, vector<640x256xbf16>, vector<8x256xf32> -> vector<8x256xf32>
    %c0_9 = arith.constant 0 : index
    %c0_10 = arith.constant 0 : index
    %12 = vector.load %arg5[%c0_9, %c0_10] : memref<1x256xf32, #tpu.memory_space<vmem>>, vector<1x256xf32>
    %13 = vector.broadcast %12 : vector<1x256xf32> to vector<8x256xf32>
    %14 = arith.addf %11, %13 : vector<8x256xf32>
    %cst_11 = arith.constant 0.000000e+00 : f32
    %15 = vector.broadcast %cst_11 : f32 to vector<8x256xf32>
    %16 = arith.maximumf %14, %15 : vector<8x256xf32>
    %17 = arith.truncf %16 : vector<8x256xf32> to vector<8x256xbf16>
    %c0_12 = arith.constant 0 : index
    %c0_13 = arith.constant 0 : index
    %18 = vector.load %arg6[%c0_12, %c0_13] : memref<256x128xbf16, #tpu.memory_space<vmem>>, vector<256x128xbf16>
    %cst_14 = arith.constant dense<0.000000e+00> : vector<8x128xf32>
    %19 = tpu.matmul %17, %18, %cst_14 {dimension_numbers = #tpu.dot_dimension_numbers<[1], [0], [0], [1], [0, 0, 1, 1], [], []>} : vector<8x256xbf16>, vector<256x128xbf16>, vector<8x128xf32> -> vector<8x128xf32>
    %c0_15 = arith.constant 0 : index
    %c0_16 = arith.constant 0 : index
    %20 = vector.load %arg7[%c0_15, %c0_16] : memref<1x128xf32, #tpu.memory_space<vmem>>, vector<1x128xf32>
    %21 = vector.broadcast %20 : vector<1x128xf32> to vector<8x128xf32>
    %22 = arith.addf %19, %21 : vector<8x128xf32>
    %c0_17 = arith.constant 0 : index
    %c0_18 = arith.constant 0 : index
    %23 = vector.load %arg8[%c0_17, %c0_18] : memref<8x128xf32, #tpu.memory_space<vmem>>, vector<8x128xf32>
    tpu.vector_store %arg8[%c0_17, %c0_18], %22 {strides = array<i32>} : memref<8x128xf32, #tpu.memory_space<vmem>>, vector<8x128xf32>,
    return
  }
  func.func @transform_0(%arg0: i32) -> (i32, i32) {
    %c0_i32 = arith.constant 0 : i32
    %c0_i32_0 = arith.constant 0 : i32
    return %arg0, %c0_i32 : i32, i32
  }
  func.func @transform_1(%arg0: i32) -> (i32, i32) {
    %c0_i32 = arith.constant 0 : i32
    %c0_i32_0 = arith.constant 0 : i32
    %c0_i32_1 = arith.constant 0 : i32
    return %c0_i32, %c0_i32_0 : i32, i32
  }
  func.func @transform_2(%arg0: i32) -> (i32, i32) {
    %c0_i32 = arith.constant 0 : i32
    %c0_i32_0 = arith.constant 0 : i32
    %c0_i32_1 = arith.constant 0 : i32
    return %c0_i32, %c0_i32_0 : i32, i32
  }
  func.func @transform_3(%arg0: i32) -> (i32, i32) {
    %c0_i32 = arith.constant 0 : i32
    %c0_i32_0 = arith.constant 0 : i32
    %c0_i32_1 = arith.constant 0 : i32
    return %c0_i32, %c0_i32_0 : i32, i32
  }
  func.func @transform_4(%arg0: i32) -> (i32, i32) {
    %c0_i32 = arith.constant 0 : i32
    %c0_i32_0 = arith.constant 0 : i32
    %c0_i32_1 = arith.constant 0 : i32
    return %c0_i32, %c0_i32_0 : i32, i32
  }
  func.func @transform_5(%arg0: i32) -> (i32, i32) {
    %c0_i32 = arith.constant 0 : i32
    %c0_i32_0 = arith.constant 0 : i32
    %c0_i32_1 = arith.constant 0 : i32
    return %c0_i32, %c0_i32_0 : i32, i32
  }
  func.func @transform_6(%arg0: i32) -> (i32, i32) {
    %c0_i32 = arith.constant 0 : i32
    %c0_i32_0 = arith.constant 0 : i32
    %c0_i32_1 = arith.constant 0 : i32
    return %c0_i32, %c0_i32_0 : i32, i32
  }
  func.func @transform_7(%arg0: i32) -> (i32, i32) {
    %c0_i32 = arith.constant 0 : i32
    %c0_i32_0 = arith.constant 0 : i32
    return %arg0, %c0_i32 : i32, i32
  }
}

</mosaic_0001>

<llo_original>
// kernel: tpu_custom_call.1
$region0: #{tpu_custom_call.1}
  #allocation0 [shape = 'u32[]', space=smem, size = 0x4, offset = 0x4, fixed_abs, tag = 'smem constant byte address 0x4 - core index']
  #allocation1 [shape = 'u32[144,128]{1,0:T(1,128)}', space=vmem, size = 0x12000, scoped, tag = 'internal scratch']
  %s0 = inlined_call_operand.vmem [shape: f32[8,4], index: 0, kind: input, shape index: {}]
  %s1 = inlined_call_operand.vmem [shape: bf16[4,640], index: 1, kind: input, shape index: {}]
  %s2 = inlined_call_operand.vmem [shape: f32[1,640], index: 2, kind: input, shape index: {}]
  %s3 = inlined_call_operand.hbm [shape: bf16[640,256], index: 3, kind: input, shape index: {}]
  %s4 = inlined_call_operand.vmem [shape: f32[1,256], index: 4, kind: input, shape index: {}]
  %s5 = inlined_call_operand.hbm [shape: bf16[256,128], index: 5, kind: input, shape index: {}]
  %s6 = inlined_call_operand.vmem [shape: f32[1,128], index: 6, kind: input, shape index: {}]
  %s7 = inlined_call_operand.hbm [shape: f32[8,128], index: 7, kind: output, shape index: {}]
  %s8 = sld [smem:[#allocation0]]
  $region46: #{tpu_custom_call.1} parent=0
    _
  %s10 = ssub.s32 1, %s8
  %s11 = scalar_select 0, %s10, %s8
  $region1: #{tpu_custom_call.1} parent=0
    #allocation2 [shape = 'u8[327680]{0}', space=vmem, size = 0x50000, scoped, tag = 'input window, operand 3, single buffered']
    #allocation3 [shape = 's32[1]{0}', space=sflag, size = 0x4, scoped, tag = 'scoped memory for tpu_custom_call.1']
    #allocation4 [shape = 's32[1]{0}', space=sflag, size = 0x4, scoped, tag = 'scoped memory for tpu_custom_call.1']
    #allocation5 [shape = 'u8[65536]{0}', space=vmem, size = 0x10000, scoped, tag = 'input window, operand 5, single buffered']
    #allocation6 [shape = 's32[1]{0}', space=sflag, size = 0x4, scoped, tag = 'scoped memory for tpu_custom_call.1']
    #allocation7 [shape = 'u8[4096]{0}', space=vmem, size = 0x1000, scoped, tag = 'output window, operand 0, single buffered']
    %12 = vsyncpa [#allocation3], 0
    %13 = vsyncpa [#allocation6], 0
    %14 = vsyncpa [#allocation4], 0
    // Predicated region
    $region2: #{tpu_custom_call.1} parent=1 // pred_check
      _
    $region3: #{tpu_custom_call.1} parent=1 // pred_check_branch
      %16 = sbr.rel (0) target = $region5
    $region4: #{tpu_custom_call.1} parent=1 // pred_region
      _
    $region5: #{tpu_custom_call.1} parent=1 // pred_fallthru
      _
    // Predicated region
    $region6: #{tpu_custom_call.1} parent=1 // pred_check
      _
    $region7: #{tpu_custom_call.1} parent=1 // pred_check_branch
      %18 = sbr.rel (0) target = $region9
    $region8: #{tpu_custom_call.1} parent=1 // pred_region
      _
    $region9: #{tpu_custom_call.1} parent=1 // pred_fallthru
      _
    // Predicated region
    $region10: #{tpu_custom_call.1} parent=1 // pred_check
      _
    $region11: #{tpu_custom_call.1} parent=1 // pred_check_branch
      %20 = sbr.rel (0) target = $region13
    $region12: #{tpu_custom_call.1} parent=1 // pred_region
      _
    $region13: #{tpu_custom_call.1} parent=1 // pred_fallthru
      _
    // Predicated region
    $region14: #{tpu_custom_call.1} parent=1 // pred_check
      _
    $region15: #{tpu_custom_call.1} parent=1 // pred_check_branch
      %22 = sbr.rel (0) target = $region17
    $region16: #{tpu_custom_call.1} parent=1 // pred_region
      %s24 = ssub.s32 10240, 10240
      %25 = vsyncadd [#allocation3], %s24
      %s26 = sshll.u32 [#allocation2], 4
      %s27 = int_to_ptr.vmem [resolvable:$true] %s26
      %32 = dma.hbm_to_vmem [thread:$0]  %s3, 10240, %s27, [#allocation3], 128, 128, 8
    $region17: #{tpu_custom_call.1} parent=1 // pred_fallthru
      _
    // Predicated region
    $region18: #{tpu_custom_call.1} parent=1 // pred_check
      _
    $region19: #{tpu_custom_call.1} parent=1 // pred_check_branch
      %34 = sbr.rel (0) target = $region21
    $region20: #{tpu_custom_call.1} parent=1 // pred_region
      _
    $region21: #{tpu_custom_call.1} parent=1 // pred_fallthru
      _
    // Predicated region
    $region22: #{tpu_custom_call.1} parent=1 // pred_check
      _
    $region23: #{tpu_custom_call.1} parent=1 // pred_check_branch
      %36 = sbr.rel (0) target = $region25
    $region24: #{tpu_custom_call.1} parent=1 // pred_region
      %s38 = ssub.s32 2048, 2048
      %39 = vsyncadd [#allocation6], %s38
      %s40 = sshll.u32 [#allocation5], 4
      %s41 = int_to_ptr.vmem [resolvable:$true] %s40
      %46 = dma.hbm_to_vmem [thread:$0]  %s5, 2048, %s41, [#allocation6], 64, 64, 4
    $region25: #{tpu_custom_call.1} parent=1 // pred_fallthru
      _
    // Predicated region
    $region26: #{tpu_custom_call.1} parent=1 // pred_check
      _
    $region27: #{tpu_custom_call.1} parent=1 // pred_check_branch
      %48 = sbr.rel (0) target = $region29
    $region28: #{tpu_custom_call.1} parent=1 // pred_region
      _
    $region29: #{tpu_custom_call.1} parent=1 // pred_fallthru
      _
    // Predicated region
    $region30: #{tpu_custom_call.1} parent=1 // pred_check
      _
    $region31: #{tpu_custom_call.1} parent=1 // pred_check_branch
      %50 = sbr.rel (0) target = $region33
    $region32: #{tpu_custom_call.1} parent=1 // pred_region
      %51 = dma.done [#allocation3], 10240
    $region33: #{tpu_custom_call.1} parent=1 // pred_fallthru
      _
    // Predicated region
    $region34: #{tpu_custom_call.1} parent=1 // pred_check
      _
    $region35: #{tpu_custom_call.1} parent=1 // pred_check_branch
      %53 = sbr.rel (0) target = $region37
    $region36: #{tpu_custom_call.1} parent=1 // pred_region
      %54 = dma.done [#allocation6], 2048
    $region37: #{tpu_custom_call.1} parent=1 // pred_fallthru
      _
    %v56 = vld [vmem:[%s0] sm:$0xff]
    %v57 = vpack.c.bf16 %v56, %v56
    %v58 = vld [vmem:[%s1] sm:$0xff]
    %v59 = vld [vmem:[%s1 + $0x8] sm:$0x3]
    %v60 = vld [vmem:[%s2] sm:$0x1f]
    %v62 = vlaneseq
    %v63 = vshrl.u32 %v62, 7
    %v64 = vsub.s32 0, %v63
    %v65 = vrot.slane %v60, %v64
    %v66 = vlaneseq
    %v67 = vshrl.u32 %v66, 7
    %v68 = vsub.s32 1, %v67
    %v69 = vrot.slane %v60, %v68
    %v70 = vlaneseq
    %v71 = vshrl.u32 %v70, 7
    %v72 = vsub.s32 2, %v71
    %v73 = vrot.slane %v60, %v72
    %v74 = vlaneseq
    %v75 = vshrl.u32 %v74, 7
    %v76 = vsub.s32 3, %v75
    %v77 = vrot.slane %v60, %v76
    %v78 = vlaneseq
    %v79 = vshrl.u32 %v78, 7
    %v80 = vsub.s32 4, %v79
    %v81 = vrot.slane %v60, %v80
    %v89 = vcombine.high %v58, %v58
    %v91 = vunpack.c.l.s4 1983009808
    %v92 = vunpack.c.0.s8 %v91
    %v93 = vlaneseq
    %v94 = vshrl.u32 %v93, 7
    %v95 = vsub.s32 %v92, %v94
    %v96 = vrot.slane %v58, %v95
    %v98 = vunpack.c.l.s4 1983009808
    %v99 = vunpack.c.0.s8 %v98
    %v100 = vlaneseq
    %v101 = vshrl.u32 %v100, 7
    %v102 = vsub.s32 %v99, %v101
    %v103 = vrot.slane %v89, %v102
    %v104 = vcombine.high %v96, %v96
    %v105 = vcombine.high %v103, %v103
    %v107 = vunpack.c.l.s4 1983009808
    %v108 = vunpack.c.0.s8 %v107
    %v109 = vlaneseq
    %v110 = vshrl.u32 %v109, 7
    %v111 = vsub.s32 %v108, %v110
    %v112 = vrot.slane %v59, %v111
    %vm113 = vcmask 31744
    %v115 = vsel %vm113, %v57, 0
    %vm117 = vcmask 1041408
    %v119 = vsel %vm117, %v96, 0
    %v122 = vsel %vm117, %v104, 0
    %v125 = vsel %vm117, %v103, 0
    %v128 = vsel %vm117, %v105, 0
    %v131 = vsel %vm117, %v112, 0
    %133 = vmatprep.subr.bf16.mxu0 %v122
    %134 = vmatpush1.bf16.msra.mxu0 %v119
    %135 = vmatprep.subr.bf16.mxu0 0
    %136 = vmatpush1.bf16.msra.mxu0 0
    %137 = vmatprep.subr.bf16.mxu0 0
    %138 = vmatpush1.bf16.msra.mxu0 0
    %139 = vmatprep.subr.bf16.mxu0 0
    %140 = vmatpush1.bf16.msra.mxu0 0
    %141 = vmatprep.subr.bf16.mxu0 0
    %142 = vmatpush1.bf16.msra.mxu0 0
    %143 = vmatprep.subr.bf16.mxu0 0
    %144 = vmatpush1.bf16.msra.mxu0 0
    %145 = vmatprep.subr.bf16.mxu0 0
    %146 = vmatpush1.bf16.msra.mxu0 0
    %147 = vmatprep.subr.bf16.mxu0 0
    %148 = vmatpush1.bf16.msra.mxu0 0
    %149 = vmatprep.subr.bf16.mxu0 0
    %150 = vmatpush1.bf16.msra.mxu0 0
    %151 = vmatprep.subr.bf16.mxu0 0
    %152 = vmatpush1.bf16.msra.mxu0 0
    %153 = vmatprep.subr.bf16.mxu0 0
    %154 = vmatpush1.bf16.msra.mxu0 0
    %155 = vmatprep.subr.bf16.mxu0 0
    %156 = vmatpush1.bf16.msra.mxu0 0
    %157 = vmatprep.subr.bf16.mxu0 0
    %158 = vmatpush1.bf16.msra.mxu0 0
    %159 = vmatprep.subr.bf16.mxu0 0
    %160 = vmatpush1.bf16.msra.mxu0 0
    %161 = vmatprep.subr.bf16.mxu0 0
    %162 = vmatpush1.bf16.msra.mxu0 0
    %163 = vmatprep.subr.bf16.mxu0 0
    %164 = vmatpush1.bf16.msra.mxu0 0
    %165 = vmatprep.mubr.bf16.mxu0 0
    %166 = vmatmul.mubr.bf16.gmra.mrb[0].mxu0 %v115
    %v167 = vpop.f32.mrb[0].mxu0
    %v168 = vadd.f32 %v65, %v167
    %v169 = vpop.f32.mrb[0].mxu0
    %v170 = vadd.f32 %v69, %v169
    %v171 = vpop.f32.mrb[0].mxu0
    %v172 = vpop.f32.mrb[0].mxu0
    %173 = vdwg.mxu0
    %174 = vmatprep.subr.bf16.mxu0 %v128
    %175 = vmatpush1.bf16.msra.mxu0 %v125
    %176 = vmatprep.subr.bf16.mxu0 0
    %177 = vmatpush1.bf16.msra.mxu0 0
    %178 = vmatprep.subr.bf16.mxu0 0
    %179 = vmatpush1.bf16.msra.mxu0 0
    %180 = vmatprep.subr.bf16.mxu0 0
    %181 = vmatpush1.bf16.msra.mxu0 0
    %182 = vmatprep.subr.bf16.mxu0 0
    %183 = vmatpush1.bf16.msra.mxu0 0
    %184 = vmatprep.subr.bf16.mxu0 0
    %185 = vmatpush1.bf16.msra.mxu0 0
    %186 = vmatprep.subr.bf16.mxu0 0
    %187 = vmatpush1.bf16.msra.mxu0 0
    %188 = vmatprep.subr.bf16.mxu0 0
    %189 = vmatpush1.bf16.msra.mxu0 0
    %190 = vmatprep.subr.bf16.mxu0 0
    %191 = vmatpush1.bf16.msra.mxu0 0
    %192 = vmatprep.subr.bf16.mxu0 0
    %193 = vmatpush1.bf16.msra.mxu0 0
    %194 = vmatprep.subr.bf16.mxu0 0
    %195 = vmatpush1.bf16.msra.mxu0 0
    %196 = vmatprep.subr.bf16.mxu0 0
    %197 = vmatpush1.bf16.msra.mxu0 0
    %198 = vmatprep.subr.bf16.mxu0 0
    %199 = vmatpush1.bf16.msra.mxu0 0
    %200 = vmatprep.subr.bf16.mxu0 0
    %201 = vmatpush1.bf16.msra.mxu0 0
    %202 = vmatprep.subr.bf16.mxu0 0
    %203 = vmatpush1.bf16.msra.mxu0 0
    %204 = vmatprep.subr.bf16.mxu0 0
    %205 = vmatpush1.bf16.msra.mxu0 0
    %206 = vmatprep.mubr.bf16.mxu0 0
    %207 = vmatmul.mubr.bf16.gmra.mrb[0].mxu0 %v115
    %v208 = vpop.f32.mrb[0].mxu0
    %v209 = vadd.f32 %v73, %v208
    %v210 = vpop.f32.mrb[0].mxu0
    %v211 = vadd.f32 %v77, %v210
    %v212 = vpop.f32.mrb[0].mxu0
    %v213 = vpop.f32.mrb[0].mxu0
    %214 = vdwg.mxu0
    %215 = vmatprep.subr.bf16.mxu0 0
    %216 = vmatpush1.bf16.msra.mxu0 %v131
    %217 = vmatprep.subr.bf16.mxu0 0
    %218 = vmatpush1.bf16.msra.mxu0 0
    %219 = vmatprep.subr.bf16.mxu0 0
    %220 = vmatpush1.bf16.msra.mxu0 0
    %221 = vmatprep.subr.bf16.mxu0 0
    %222 = vmatpush1.bf16.msra.mxu0 0
    %223 = vmatprep.subr.bf16.mxu0 0
    %224 = vmatpush1.bf16.msra.mxu0 0
    %225 = vmatprep.subr.bf16.mxu0 0
    %226 = vmatpush1.bf16.msra.mxu0 0
    %227 = vmatprep.subr.bf16.mxu0 0
    %228 = vmatpush1.bf16.msra.mxu0 0
    %229 = vmatprep.subr.bf16.mxu0 0
    %230 = vmatpush1.bf16.msra.mxu0 0
    %231 = vmatprep.subr.bf16.mxu0 0
    %232 = vmatpush1.bf16.msra.mxu0 0
    %233 = vmatprep.subr.bf16.mxu0 0
    %234 = vmatpush1.bf16.msra.mxu0 0
    %235 = vmatprep.subr.bf16.mxu0 0
    %236 = vmatpush1.bf16.msra.mxu0 0
    %237 = vmatprep.subr.bf16.mxu0 0
    %238 = vmatpush1.bf16.msra.mxu0 0
    %239 = vmatprep.subr.bf16.mxu0 0
    %240 = vmatpush1.bf16.msra.mxu0 0
    %241 = vmatprep.subr.bf16.mxu0 0
    %242 = vmatpush1.bf16.msra.mxu0 0
    %243 = vmatprep.subr.bf16.mxu0 0
    %244 = vmatpush1.bf16.msra.mxu0 0
    %245 = vmatprep.subr.bf16.mxu0 0
    %246 = vmatpush1.bf16.msra.mxu0 0
    %247 = vmatprep.mubr.bf16.mxu0 0
    %248 = vmatmul.mubr.bf16.gmra.mrb[0].mxu0 %v115
    %v249 = vpop.f32.mrb[0].mxu0
    %v250 = vadd.f32 %v81, %v249
    %v251 = vpop.f32.mrb[0].mxu0
    %v252 = vpop.f32.mrb[0].mxu0
    %v253 = vpop.f32.mrb[0].mxu0
    %254 = vdwg.mxu0
    %v255 = vmax.f32 %v168, 0.0
    %v256 = vmax.f32 %v170, 0.0
    %v257 = vmax.f32 %v209, 0.0
    %v258 = vmax.f32 %v211, 0.0
    %v259 = vmax.f32 %v250, 0.0
    %v260 = vpack.c.bf16 %v255, %v255
    %v261 = vpack.c.bf16 %v256, %v256
    %v262 = vpack.c.bf16 %v257, %v257
    %v263 = vpack.c.bf16 %v258, %v258
    %v264 = vpack.c.bf16 %v259, %v259
    %v265 = vld [vmem:[#allocation2] sm:$0xff]
    %v266 = vld [vmem:[#allocation2 + $0x8] sm:$0xff]
    %v267 = vld [vmem:[#allocation2 + $0x10] sm:$0xff]
    %v268 = vld [vmem:[#allocation2 + $0x18] sm:$0xff]
    %v269 = vld [vmem:[#allocation2 + $0x20] sm:$0xff]
    %v270 = vld [vmem:[#allocation2 + $0x28] sm:$0xff]
    %v271 = vld [vmem:[#allocation2 + $0x30] sm:$0xff]
    %v272 = vld [vmem:[#allocation2 + $0x38] sm:$0xff]
    %v273 = vld [vmem:[#allocation2 + $0x40] sm:$0xff]
    %v274 = vld [vmem:[#allocation2 + $0x48] sm:$0xff]
    %v275 = vld [vmem:[#allocation2 + $0x50] sm:$0xff]
    %v276 = vld [vmem:[#allocation2 + $0x58] sm:$0xff]
    %v277 = vld [vmem:[#allocation2 + $0x60] sm:$0xff]
    %v278 = vld [vmem:[#allocation2 + $0x68] sm:$0xff]
    %v279 = vld [vmem:[#allocation2 + $0x70] sm:$0xff]
    %v280 = vld [vmem:[#allocation2 + $0x78] sm:$0xff]
    %v281 = vld [vmem:[#allocation2 + $0x80] sm:$0xff]
    %v282 = vld [vmem:[#allocation2 + $0x88] sm:$0xff]
    %v283 = vld [vmem:[#allocation2 + $0x90] sm:$0xff]
    %v284 = vld [vmem:[#allocation2 + $0x98] sm:$0xff]
    %v285 = vld [vmem:[#allocation2 + $0xa0] sm:$0xff]
    %v286 = vld [vmem:[#allocation2 + $0xa8] sm:$0xff]
    %v287 = vld [vmem:[#allocation2 + $0xb0] sm:$0xff]
    %v288 = vld [vmem:[#allocation2 + $0xb8] sm:$0xff]
    %v289 = vld [vmem:[#allocation2 + $0xc0] sm:$0xff]
    %v290 = vld [vmem:[#allocation2 + $0xc8] sm:$0xff]
    %v291 = vld [vmem:[#allocation2 + $0xd0] sm:$0xff]
    %v292 = vld [vmem:[#allocation2 + $0xd8] sm:$0xff]
    %v293 = vld [vmem:[#allocation2 + $0xe0] sm:$0xff]
    %v294 = vld [vmem:[#allocation2 + $0xe8] sm:$0xff]
    %v295 = vld [vmem:[#allocation2 + $0xf0] sm:$0xff]
    %v296 = vld [vmem:[#allocation2 + $0xf8] sm:$0xff]
    %v297 = vld [vmem:[#allocation2 + $0x100] sm:$0xff]
    %v298 = vld [vmem:[#allocation2 + $0x108] sm:$0xff]
    %v299 = vld [vmem:[#allocation2 + $0x110] sm:$0xff]
    %v300 = vld [vmem:[#allocation2 + $0x118] sm:$0xff]
    %v301 = vld [vmem:[#allocation2 + $0x120] sm:$0xff]
    %v302 = vld [vmem:[#allocation2 + $0x128] sm:$0xff]
    %v303 = vld [vmem:[#allocation2 + $0x130] sm:$0xff]
    %v304 = vld [vmem:[#allocation2 + $0x138] sm:$0xff]
    %v305 = vld [vmem:[#allocation2 + $0x140] sm:$0xff]
    %v306 = vld [vmem:[#allocation2 + $0x148] sm:$0xff]
    %v307 = vld [vmem:[#allocation2 + $0x150] sm:$0xff]
    %v308 = vld [vmem:[#allocation2 + $0x158] sm:$0xff]
    %v309 = vld [vmem:[#allocation2 + $0x160] sm:$0xff]
    %v310 = vld [vmem:[#allocation2 + $0x168] sm:$0xff]
    %v311 = vld [vmem:[#allocation2 + $0x170] sm:$0xff]
    %v312 = vld [vmem:[#allocation2 + $0x178] sm:$0xff]
    %v313 = vld [vmem:[#allocation2 + $0x180] sm:$0xff]
    %v314 = vld [vmem:[#allocation2 + $0x188] sm:$0xff]
    %v315 = vld [vmem:[#allocation2 + $0x190] sm:$0xff]
    %v316 = vld [vmem:[#allocation2 + $0x198] sm:$0xff]
    %v317 = vld [vmem:[#allocation2 + $0x1a0] sm:$0xff]
    %v318 = vld [vmem:[#allocation2 + $0x1a8] sm:$0xff]
    %v319 = vld [vmem:[#allocation2 + $0x1b0] sm:$0xff]
    %v320 = vld [vmem:[#allocation2 + $0x1b8] sm:$0xff]
    %v321 = vld [vmem:[#allocation2 + $0x1c0] sm:$0xff]
    %v322 = vld [vmem:[#allocation2 + $0x1c8] sm:$0xff]
    %v323 = vld [vmem:[#allocation2 + $0x1d0] sm:$0xff]
    %v324 = vld [vmem:[#allocation2 + $0x1d8] sm:$0xff]
    %v325 = vld [vmem:[#allocation2 + $0x1e0] sm:$0xff]
    %v326 = vld [vmem:[#allocation2 + $0x1e8] sm:$0xff]
    %v327 = vld [vmem:[#allocation2 + $0x1f0] sm:$0xff]
    %v328 = vld [vmem:[#allocation2 + $0x1f8] sm:$0xff]
    %v329 = vld [vmem:[#allocation2 + $0x200] sm:$0xff]
    %v330 = vld [vmem:[#allocation2 + $0x208] sm:$0xff]
    %v331 = vld [vmem:[#allocation2 + $0x210] sm:$0xff]
    %v332 = vld [vmem:[#allocation2 + $0x218] sm:$0xff]
    %v333 = vld [vmem:[#allocation2 + $0x220] sm:$0xff]
    %v334 = vld [vmem:[#allocation2 + $0x228] sm:$0xff]
    %v335 = vld [vmem:[#allocation2 + $0x230] sm:$0xff]
    %v336 = vld [vmem:[#allocation2 + $0x238] sm:$0xff]
    %v337 = vld [vmem:[#allocation2 + $0x240] sm:$0xff]
    %v338 = vld [vmem:[#allocation2 + $0x248] sm:$0xff]
    %v339 = vld [vmem:[#allocation2 + $0x250] sm:$0xff]
    %v340 = vld [vmem:[#allocation2 + $0x258] sm:$0xff]
    %v341 = vld [vmem:[#allocation2 + $0x260] sm:$0xff]
    %v342 = vld [vmem:[#allocation2 + $0x268] sm:$0xff]
    %v343 = vld [vmem:[#allocation2 + $0x270] sm:$0xff]
    %v344 = vld [vmem:[#allocation2 + $0x278] sm:$0xff]
    %v345 = vld [vmem:[%s4] sm:$0x3]
    %v347 = vlaneseq
    %v348 = vshrl.u32 %v347, 7
    %v349 = vsub.s32 0, %v348
    %v350 = vrot.slane %v345, %v349
    %v351 = vlaneseq
    %v352 = vshrl.u32 %v351, 7
    %v353 = vsub.s32 1, %v352
    %v354 = vrot.slane %v345, %v353
    %v437 = vunpack.c.l.b16 %v265
    %v438 = vunpack.c.h.b16 %v265
    %v439 = vunpack.c.l.b16 %v266
    %v440 = vunpack.c.h.b16 %v266
    %v441 = vunpack.c.l.b16 %v267
    %v442 = vunpack.c.h.b16 %v267
    %v443 = vunpack.c.l.b16 %v268
    %v444 = vunpack.c.h.b16 %v268
    %v445 = vunpack.c.l.b16 %v269
    %v446 = vunpack.c.h.b16 %v269
    %v447 = vunpack.c.l.b16 %v270
    %v448 = vunpack.c.h.b16 %v270
    %v449 = vunpack.c.l.b16 %v271
    %v450 = vunpack.c.h.b16 %v271
    %v451 = vunpack.c.l.b16 %v272
    %v452 = vunpack.c.h.b16 %v272
    %v453 = vunpack.c.l.b16 %v273
    %v454 = vunpack.c.h.b16 %v273
    %v455 = vunpack.c.l.b16 %v274
    %v456 = vunpack.c.h.b16 %v274
    %v457 = vunpack.c.l.b16 %v275
    %v458 = vunpack.c.h.b16 %v275
    %v459 = vunpack.c.l.b16 %v276
    %v460 = vunpack.c.h.b16 %v276
    %v461 = vunpack.c.l.b16 %v277
    %v462 = vunpack.c.h.b16 %v277
    %v463 = vunpack.c.l.b16 %v278
    %v464 = vunpack.c.h.b16 %v278
    %v465 = vunpack.c.l.b16 %v279
    %v466 = vunpack.c.h.b16 %v279
    %v467 = vunpack.c.l.b16 %v280
    %v468 = vunpack.c.h.b16 %v280
    %v469 = vunpack.c.l.b16 %v281
    %v470 = vunpack.c.h.b16 %v281
    %v471 = vunpack.c.l.b16 %v282
    %v472 = vunpack.c.h.b16 %v282
    %v473 = vunpack.c.l.b16 %v283
    %v474 = vunpack.c.h.b16 %v283
    %v475 = vunpack.c.l.b16 %v284
    %v476 = vunpack.c.h.b16 %v284
    %v477 = vunpack.c.l.b16 %v285
    %v478 = vunpack.c.h.b16 %v285
    %v479 = vunpack.c.l.b16 %v286
    %v480 = vunpack.c.h.b16 %v286
    %v481 = vunpack.c.l.b16 %v287
    %v482 = vunpack.c.h.b16 %v287
    %v483 = vunpack.c.l.b16 %v288
    %v484 = vunpack.c.h.b16 %v288
    %v485 = vunpack.c.l.b16 %v289
    %v486 = vunpack.c.h.b16 %v289
    %v487 = vunpack.c.l.b16 %v290
    %v488 = vunpack.c.h.b16 %v290
    %v489 = vunpack.c.l.b16 %v291
    %v490 = vunpack.c.h.b16 %v291
    %v491 = vunpack.c.l.b16 %v292
    %v492 = vunpack.c.h.b16 %v292
    %v493 = vunpack.c.l.b16 %v293
    %v494 = vunpack.c.h.b16 %v293
    %v495 = vunpack.c.l.b16 %v294
    %v496 = vunpack.c.h.b16 %v294
    %v497 = vunpack.c.l.b16 %v295
    %v498 = vunpack.c.h.b16 %v295
    %v499 = vunpack.c.l.b16 %v296
    %v500 = vunpack.c.h.b16 %v296
    %v501 = vunpack.c.l.b16 %v297
    %v502 = vunpack.c.h.b16 %v297
    %v503 = vunpack.c.l.b16 %v298
    %v504 = vunpack.c.h.b16 %v298
    %v505 = vunpack.c.l.b16 %v299
    %v506 = vunpack.c.h.b16 %v299
    %v507 = vunpack.c.l.b16 %v300
    %v508 = vunpack.c.h.b16 %v300
    %v509 = vunpack.c.l.b16 %v301
    %v510 = vunpack.c.h.b16 %v301
    %v511 = vunpack.c.l.b16 %v302
    %v512 = vunpack.c.h.b16 %v302
    %v513 = vunpack.c.l.b16 %v303
    %v514 = vunpack.c.h.b16 %v303
    %v515 = vunpack.c.l.b16 %v304
    %v516 = vunpack.c.h.b16 %v304
    %v517 = vunpack.c.l.b16 %v305
    %v518 = vunpack.c.h.b16 %v305
    %v519 = vunpack.c.l.b16 %v306
    %v520 = vunpack.c.h.b16 %v306
    %v521 = vunpack.c.l.b16 %v307
    %v522 = vunpack.c.h.b16 %v307
    %v523 = vunpack.c.l.b16 %v308
    %v524 = vunpack.c.h.b16 %v308
    %v525 = vunpack.c.l.b16 %v309
    %v526 = vunpack.c.h.b16 %v309
    %v527 = vunpack.c.l.b16 %v310
    %v528 = vunpack.c.h.b16 %v310
    %v529 = vunpack.c.l.b16 %v311
    %v530 = vunpack.c.h.b16 %v311
    %v531 = vunpack.c.l.b16 %v312
    %v532 = vunpack.c.h.b16 %v312
    %v533 = vunpack.c.l.b16 %v313
    %v534 = vunpack.c.h.b16 %v313
    %v535 = vunpack.c.l.b16 %v314
    %v536 = vunpack.c.h.b16 %v314
    %v537 = vunpack.c.l.b16 %v315
    %v538 = vunpack.c.h.b16 %v315
    %v539 = vunpack.c.l.b16 %v316
    %v540 = vunpack.c.h.b16 %v316
    %v541 = vunpack.c.l.b16 %v317
    %v542 = vunpack.c.h.b16 %v317
    %v543 = vunpack.c.l.b16 %v318
    %v544 = vunpack.c.h.b16 %v318
    %v545 = vunpack.c.l.b16 %v319
    %v546 = vunpack.c.h.b16 %v319
    %v547 = vunpack.c.l.b16 %v320
    %v548 = vunpack.c.h.b16 %v320
    %v549 = vunpack.c.l.b16 %v321
    %v550 = vunpack.c.h.b16 %v321
    %v551 = vunpack.c.l.b16 %v322
    %v552 = vunpack.c.h.b16 %v322
    %v553 = vunpack.c.l.b16 %v323
    %v554 = vunpack.c.h.b16 %v323
    %v555 = vunpack.c.l.b16 %v324
    %v556 = vunpack.c.h.b16 %v324
    %v557 = vunpack.c.l.b16 %v325
    %v558 = vunpack.c.h.b16 %v325
    %v559 = vunpack.c.l.b16 %v326
    %v560 = vunpack.c.h.b16 %v326
    %v561 = vunpack.c.l.b16 %v327
    %v562 = vunpack.c.h.b16 %v327
    %v563 = vunpack.c.l.b16 %v328
    %v564 = vunpack.c.h.b16 %v328
    %v565 = vunpack.c.l.b16 %v329
    %v566 = vunpack.c.h.b16 %v329
    %v567 = vunpack.c.l.b16 %v330
    %v568 = vunpack.c.h.b16 %v330
    %v569 = vunpack.c.l.b16 %v331
    %v570 = vunpack.c.h.b16 %v331
    %v571 = vunpack.c.l.b16 %v332
    %v572 = vunpack.c.h.b16 %v332
    %v573 = vunpack.c.l.b16 %v333
    %v574 = vunpack.c.h.b16 %v333
    %v575 = vunpack.c.l.b16 %v334
    %v576 = vunpack.c.h.b16 %v334
    %v577 = vunpack.c.l.b16 %v335
    %v578 = vunpack.c.h.b16 %v335
    %v579 = vunpack.c.l.b16 %v336
    %v580 = vunpack.c.h.b16 %v336
    %v581 = vunpack.c.l.b16 %v337
    %v582 = vunpack.c.h.b16 %v337
    %v583 = vunpack.c.l.b16 %v338
    %v584 = vunpack.c.h.b16 %v338
    %v585 = vunpack.c.l.b16 %v339
    %v586 = vunpack.c.h.b16 %v339
    %v587 = vunpack.c.l.b16 %v340
    %v588 = vunpack.c.h.b16 %v340
    %v589 = vunpack.c.l.b16 %v341
    %v590 = vunpack.c.h.b16 %v341
    %v591 = vunpack.c.l.b16 %v342
    %v592 = vunpack.c.h.b16 %v342
    %v593 = vunpack.c.l.b16 %v343
    %v594 = vunpack.c.h.b16 %v343
    %v595 = vunpack.c.l.b16 %v344
    %v596 = vunpack.c.h.b16 %v344
    %v597 = vpack.c.b16 %v439, %v437
    %v598 = vpack.c.b16 %v440, %v438
    %v599 = vpack.c.b16 %v443, %v441
    %v600 = vpack.c.b16 %v444, %v442
    %v601 = vpack.c.b16 %v447, %v445
    %v602 = vpack.c.b16 %v448, %v446
    %v603 = vpack.c.b16 %v451, %v449
    %v604 = vpack.c.b16 %v452, %v450
    %v605 = vpack.c.b16 %v455, %v453
    %v606 = vpack.c.b16 %v456, %v454
    %v607 = vpack.c.b16 %v459, %v457
    %v608 = vpack.c.b16 %v460, %v458
    %v609 = vpack.c.b16 %v463, %v461
    %v610 = vpack.c.b16 %v464, %v462
    %v611 = vpack.c.b16 %v467, %v465
    %v612 = vpack.c.b16 %v468, %v466
    %v613 = vpack.c.b16 %v471, %v469
    %v614 = vpack.c.b16 %v472, %v470
    %v615 = vpack.c.b16 %v475, %v473
    %v616 = vpack.c.b16 %v476, %v474
    %v617 = vpack.c.b16 %v479, %v477
    %v618 = vpack.c.b16 %v480, %v478
    %v619 = vpack.c.b16 %v483, %v481
    %v620 = vpack.c.b16 %v484, %v482
    %v621 = vpack.c.b16 %v487, %v485
    %v622 = vpack.c.b16 %v488, %v486
    %v623 = vpack.c.b16 %v491, %v489
    %v624 = vpack.c.b16 %v492, %v490
    %v625 = vpack.c.b16 %v495, %v493
    %v626 = vpack.c.b16 %v496, %v494
    %v627 = vpack.c.b16 %v499, %v497
    %v628 = vpack.c.b16 %v500, %v498
    %v629 = vpack.c.b16 %v503, %v501
    %v630 = vpack.c.b16 %v504, %v502
    %v631 = vpack.c.b16 %v507, %v505
    %v632 = vpack.c.b16 %v508, %v506
    %v633 = vpack.c.b16 %v511, %v509
    %v634 = vpack.c.b16 %v512, %v510
    %v635 = vpack.c.b16 %v515, %v513
    %v636 = vpack.c.b16 %v516, %v514
    %v637 = vpack.c.b16 %v519, %v517
    %v638 = vpack.c.b16 %v520, %v518
    %v639 = vpack.c.b16 %v523, %v521
    %v640 = vpack.c.b16 %v524, %v522
    %v641 = vpack.c.b16 %v527, %v525
    %v642 = vpack.c.b16 %v528, %v526
    %v643 = vpack.c.b16 %v531, %v529
    %v644 = vpack.c.b16 %v532, %v530
    %v645 = vpack.c.b16 %v535, %v533
    %v646 = vpack.c.b16 %v536, %v534
    %v647 = vpack.c.b16 %v539, %v537
    %v648 = vpack.c.b16 %v540, %v538
    %v649 = vpack.c.b16 %v543, %v541
    %v650 = vpack.c.b16 %v544, %v542
    %v651 = vpack.c.b16 %v547, %v545
    %v652 = vpack.c.b16 %v548, %v546
    %v653 = vpack.c.b16 %v551, %v549
    %v654 = vpack.c.b16 %v552, %v550
    %v655 = vpack.c.b16 %v555, %v553
    %v656 = vpack.c.b16 %v556, %v554
    %v657 = vpack.c.b16 %v559, %v557
    %v658 = vpack.c.b16 %v560, %v558
    %v659 = vpack.c.b16 %v563, %v561
    %v660 = vpack.c.b16 %v564, %v562
    %v661 = vpack.c.b16 %v567, %v565
    %v662 = vpack.c.b16 %v568, %v566
    %v663 = vpack.c.b16 %v571, %v569
    %v664 = vpack.c.b16 %v572, %v570
    %v665 = vpack.c.b16 %v575, %v573
    %v666 = vpack.c.b16 %v576, %v574
    %v667 = vpack.c.b16 %v579, %v577
    %v668 = vpack.c.b16 %v580, %v578
    %v669 = vpack.c.b16 %v583, %v581
    %v670 = vpack.c.b16 %v584, %v582
    %v671 = vpack.c.b16 %v587, %v585
    %v672 = vpack.c.b16 %v588, %v586
    %v673 = vpack.c.b16 %v591, %v589
    %v674 = vpack.c.b16 %v592, %v590
    %v675 = vpack.c.b16 %v595, %v593
    %v676 = vpack.c.b16 %v596, %v594
    %757 = vmatprep.subr.bf16.mxu0 %v598
    %758 = vmatpush1.bf16.msra.mxu0 %v597
    %759 = vmatprep.subr.bf16.mxu0 %v600
    %760 = vmatpush1.bf16.msra.mxu0 %v599
    %761 = vmatprep.subr.bf16.mxu0 %v602
    %762 = vmatpush1.bf16.msra.mxu0 %v601
    %763 = vmatprep.subr.bf16.mxu0 %v604
    %764 = vmatpush1.bf16.msra.mxu0 %v603
    %765 = vmatprep.subr.bf16.mxu0 %v606
    %766 = vmatpush1.bf16.msra.mxu0 %v605
    %767 = vmatprep.subr.bf16.mxu0 %v608
    %768 = vmatpush1.bf16.msra.mxu0 %v607
    %769 = vmatprep.subr.bf16.mxu0 %v610
    %770 = vmatpush1.bf16.msra.mxu0 %v609
    %771 = vmatprep.subr.bf16.mxu0 %v612
    %772 = vmatpush1.bf16.msra.mxu0 %v611
    %773 = vmatprep.subr.bf16.mxu0 %v614
    %774 = vmatpush1.bf16.msra.mxu0 %v613
    %775 = vmatprep.subr.bf16.mxu0 %v616
    %776 = vmatpush1.bf16.msra.mxu0 %v615
    %777 = vmatprep.subr.bf16.mxu0 %v618
    %778 = vmatpush1.bf16.msra.mxu0 %v617
    %779 = vmatprep.subr.bf16.mxu0 %v620
    %780 = vmatpush1.bf16.msra.mxu0 %v619
    %781 = vmatprep.subr.bf16.mxu0 %v622
    %782 = vmatpush1.bf16.msra.mxu0 %v621
    %783 = vmatprep.subr.bf16.mxu0 %v624
    %784 = vmatpush1.bf16.msra.mxu0 %v623
    %785 = vmatprep.subr.bf16.mxu0 %v626
    %786 = vmatpush1.bf16.msra.mxu0 %v625
    %787 = vmatprep.subr.bf16.mxu0 %v628
    %788 = vmatpush1.bf16.msra.mxu0 %v627
    %789 = vmatprep.mubr.bf16.mxu0 %v261
    %790 = vmatmul.mubr.bf16.gmra.mrb[0].mxu0 %v260
    %v791 = vpop.f32.mrb[0].mxu0
    %v792 = vadd.f32 %v350, %v791
    %v793 = vpop.f32.mrb[0].mxu0
    %v794 = vadd.f32 %v354, %v793
    %v795 = vpop.f32.mrb[0].mxu0
    %v796 = vpop.f32.mrb[0].mxu0
    %797 = vdwg.mxu0
    %798 = vmatprep.subr.bf16.mxu0 %v630
    %799 = vmatpush1.bf16.msra.mxu0 %v629
    %800 = vmatprep.subr.bf16.mxu0 %v632
    %801 = vmatpush1.bf16.msra.mxu0 %v631
    %802 = vmatprep.subr.bf16.mxu0 %v634
    %803 = vmatpush1.bf16.msra.mxu0 %v633
    %804 = vmatprep.subr.bf16.mxu0 %v636
    %805 = vmatpush1.bf16.msra.mxu0 %v635
    %806 = vmatprep.subr.bf16.mxu0 %v638
    %807 = vmatpush1.bf16.msra.mxu0 %v637
    %808 = vmatprep.subr.bf16.mxu0 %v640
    %809 = vmatpush1.bf16.msra.mxu0 %v639
    %810 = vmatprep.subr.bf16.mxu0 %v642
    %811 = vmatpush1.bf16.msra.mxu0 %v641
    %812 = vmatprep.subr.bf16.mxu0 %v644
    %813 = vmatpush1.bf16.msra.mxu0 %v643
    %814 = vmatprep.subr.bf16.mxu0 %v646
    %815 = vmatpush1.bf16.msra.mxu0 %v645
    %816 = vmatprep.subr.bf16.mxu0 %v648
    %817 = vmatpush1.bf16.msra.mxu0 %v647
    %818 = vmatprep.subr.bf16.mxu0 %v650
    %819 = vmatpush1.bf16.msra.mxu0 %v649
    %820 = vmatprep.subr.bf16.mxu0 %v652
    %821 = vmatpush1.bf16.msra.mxu0 %v651
    %822 = vmatprep.subr.bf16.mxu0 %v654
    %823 = vmatpush1.bf16.msra.mxu0 %v653
    %824 = vmatprep.subr.bf16.mxu0 %v656
    %825 = vmatpush1.bf16.msra.mxu0 %v655
    %826 = vmatprep.subr.bf16.mxu0 %v658
    %827 = vmatpush1.bf16.msra.mxu0 %v657
    %828 = vmatprep.subr.bf16.mxu0 %v660
    %829 = vmatpush1.bf16.msra.mxu0 %v659
    %830 = vmatprep.mubr.bf16.mxu0 %v263
    %831 = vmatmul.mubr.bf16.gmra.mrb[0].mxu0 %v262
    %v832 = vpop.f32.mrb[0].mxu0
    %v833 = vadd.f32 %v792, %v832
    %v834 = vpop.f32.mrb[0].mxu0
    %v835 = vadd.f32 %v794, %v834
    %v836 = vpop.f32.mrb[0].mxu0
    %v837 = vpop.f32.mrb[0].mxu0
    %838 = vdwg.mxu0
    %839 = vmatprep.subr.bf16.mxu0 %v662
    %840 = vmatpush1.bf16.msra.mxu0 %v661
    %841 = vmatprep.subr.bf16.mxu0 %v664
    %842 = vmatpush1.bf16.msra.mxu0 %v663
    %843 = vmatprep.subr.bf16.mxu0 %v666
    %844 = vmatpush1.bf16.msra.mxu0 %v665
    %845 = vmatprep.subr.bf16.mxu0 %v668
    %846 = vmatpush1.bf16.msra.mxu0 %v667
    %847 = vmatprep.subr.bf16.mxu0 %v670
    %848 = vmatpush1.bf16.msra.mxu0 %v669
    %849 = vmatprep.subr.bf16.mxu0 %v672
    %850 = vmatpush1.bf16.msra.mxu0 %v671
    %851 = vmatprep.subr.bf16.mxu0 %v674
    %852 = vmatpush1.bf16.msra.mxu0 %v673
    %853 = vmatprep.subr.bf16.mxu0 %v676
    %854 = vmatpush1.bf16.msra.mxu0 %v675
    %855 = vmatprep.subr.bf16.mxu0 0
    %856 = vmatpush1.bf16.msra.mxu0 0
    %857 = vmatprep.subr.bf16.mxu0 0
    %858 = vmatpush1.bf16.msra.mxu0 0
    %859 = vmatprep.subr.bf16.mxu0 0
    %860 = vmatpush1.bf16.msra.mxu0 0
    %861 = vmatprep.subr.bf16.mxu0 0
    %862 = vmatpush1.bf16.msra.mxu0 0
    %863 = vmatprep.subr.bf16.mxu0 0
    %864 = vmatpush1.bf16.msra.mxu0 0
    %865 = vmatprep.subr.bf16.mxu0 0
    %866 = vmatpush1.bf16.msra.mxu0 0
    %867 = vmatprep.subr.bf16.mxu0 0
    %868 = vmatpush1.bf16.msra.mxu0 0
    %869 = vmatprep.subr.bf16.mxu0 0
    %870 = vmatpush1.bf16.msra.mxu0 0
    %871 = vmatprep.mubr.bf16.mxu0 0
    %872 = vmatmul.mubr.bf16.gmra.mrb[0].mxu0 %v264
    %v873 = vpop.f32.mrb[0].mxu0
    %v874 = vadd.f32 %v833, %v873
    %v875 = vpop.f32.mrb[0].mxu0
    %v876 = vadd.f32 %v835, %v875
    %v877 = vpop.f32.mrb[0].mxu0
    %v878 = vpop.f32.mrb[0].mxu0
    %879 = vdwg.mxu0
    %v880 = vmax.f32 %v874, 0.0
    %v881 = vmax.f32 %v876, 0.0
    %v882 = vpack.c.bf16 %v880, %v880
    %v883 = vpack.c.bf16 %v881, %v881
    %v884 = vld [vmem:[#allocation5] sm:$0xf]
    %v885 = vld [vmem:[#allocation5 + $0x4] sm:$0xf]
    %v886 = vld [vmem:[#allocation5 + $0x8] sm:$0xf]
    %v887 = vld [vmem:[#allocation5 + $0xc] sm:$0xf]
    %v888 = vld [vmem:[#allocation5 + $0x10] sm:$0xf]
    %v889 = vld [vmem:[#allocation5 + $0x14] sm:$0xf]
    %v890 = vld [vmem:[#allocation5 + $0x18] sm:$0xf]
    %v891 = vld [vmem:[#allocation5 + $0x1c] sm:$0xf]
    %v892 = vld [vmem:[#allocation5 + $0x20] sm:$0xf]
    %v893 = vld [vmem:[#allocation5 + $0x24] sm:$0xf]
    %v894 = vld [vmem:[#allocation5 + $0x28] sm:$0xf]
    %v895 = vld [vmem:[#allocation5 + $0x2c] sm:$0xf]
    %v896 = vld [vmem:[#allocation5 + $0x30] sm:$0xf]
    %v897 = vld [vmem:[#allocation5 + $0x34] sm:$0xf]
    %v898 = vld [vmem:[#allocation5 + $0x38] sm:$0xf]
    %v899 = vld [vmem:[#allocation5 + $0x3c] sm:$0xf]
    %v900 = vld [vmem:[#allocation5 + $0x40] sm:$0xf]
    %v901 = vld [vmem:[#allocation5 + $0x44] sm:$0xf]
    %v902 = vld [vmem:[#allocation5 + $0x48] sm:$0xf]
    %v903 = vld [vmem:[#allocation5 + $0x4c] sm:$0xf]
    %v904 = vld [vmem:[#allocation5 + $0x50] sm:$0xf]
    %v905 = vld [vmem:[#allocation5 + $0x54] sm:$0xf]
    %v906 = vld [vmem:[#allocation5 + $0x58] sm:$0xf]
    %v907 = vld [vmem:[#allocation5 + $0x5c] sm:$0xf]
    %v908 = vld [vmem:[#allocation5 + $0x60] sm:$0xf]
    %v909 = vld [vmem:[#allocation5 + $0x64] sm:$0xf]
    %v910 = vld [vmem:[#allocation5 + $0x68] sm:$0xf]
    %v911 = vld [vmem:[#allocation5 + $0x6c] sm:$0xf]
    %v912 = vld [vmem:[#allocation5 + $0x70] sm:$0xf]
    %v913 = vld [vmem:[#allocation5 + $0x74] sm:$0xf]
    %v914 = vld [vmem:[#allocation5 + $0x78] sm:$0xf]
    %v915 = vld [vmem:[#allocation5 + $0x7c] sm:$0xf]
    %v916 = vld [vmem:[%s6] sm:$0x1]
    %v918 = vlaneseq
    %v919 = vshrl.u32 %v918, 7
    %v920 = vsub.s32 0, %v919
    %v921 = vrot.slane %v916, %v920
    %v955 = vunpack.c.l.b16 %v884
    %v956 = vunpack.c.l.b16 %v885
    %v957 = vunpack.c.l.b16 %v886
    %v958 = vunpack.c.l.b16 %v887
    %v959 = vunpack.c.l.b16 %v888
    %v960 = vunpack.c.l.b16 %v889
    %v961 = vunpack.c.l.b16 %v890
    %v962 = vunpack.c.l.b16 %v891
    %v963 = vunpack.c.l.b16 %v892
    %v964 = vunpack.c.l.b16 %v893
    %v965 = vunpack.c.l.b16 %v894
    %v966 = vunpack.c.l.b16 %v895
    %v967 = vunpack.c.l.b16 %v896
    %v968 = vunpack.c.l.b16 %v897
    %v969 = vunpack.c.l.b16 %v898
    %v970 = vunpack.c.l.b16 %v899
    %v971 = vunpack.c.l.b16 %v900
    %v972 = vunpack.c.l.b16 %v901
    %v973 = vunpack.c.l.b16 %v902
    %v974 = vunpack.c.l.b16 %v903
    %v975 = vunpack.c.l.b16 %v904
    %v976 = vunpack.c.l.b16 %v905
    %v977 = vunpack.c.l.b16 %v906
    %v978 = vunpack.c.l.b16 %v907
    %v979 = vunpack.c.l.b16 %v908
    %v980 = vunpack.c.l.b16 %v909
    %v981 = vunpack.c.l.b16 %v910
    %v982 = vunpack.c.l.b16 %v911
    %v983 = vunpack.c.l.b16 %v912
    %v984 = vunpack.c.l.b16 %v913
    %v985 = vunpack.c.l.b16 %v914
    %v986 = vunpack.c.l.b16 %v915
    %v987 = vpack.c.b16 %v956, %v955
    %v988 = vpack.c.b16 %v958, %v957
    %v989 = vpack.c.b16 %v960, %v959
    %v990 = vpack.c.b16 %v962, %v961
    %v991 = vpack.c.b16 %v964, %v963
    %v992 = vpack.c.b16 %v966, %v965
    %v993 = vpack.c.b16 %v968, %v967
    %v994 = vpack.c.b16 %v970, %v969
    %v995 = vpack.c.b16 %v972, %v971
    %v996 = vpack.c.b16 %v974, %v973
    %v997 = vpack.c.b16 %v976, %v975
    %v998 = vpack.c.b16 %v978, %v977
    %v999 = vpack.c.b16 %v980, %v979
    %v1000 = vpack.c.b16 %v982, %v981
    %v1001 = vpack.c.b16 %v984, %v983
    %v1002 = vpack.c.b16 %v986, %v985
    %1019 = vmatprep.subr.bf16.mxu0 0
    %1020 = vmatpush1.bf16.msra.mxu0 %v987
    %1021 = vmatprep.subr.bf16.mxu0 0
    %1022 = vmatpush1.bf16.msra.mxu0 %v988
    %1023 = vmatprep.subr.bf16.mxu0 0
    %1024 = vmatpush1.bf16.msra.mxu0 %v989
    %1025 = vmatprep.subr.bf16.mxu0 0
    %1026 = vmatpush1.bf16.msra.mxu0 %v990
    %1027 = vmatprep.subr.bf16.mxu0 0
    %1028 = vmatpush1.bf16.msra.mxu0 %v991
    %1029 = vmatprep.subr.bf16.mxu0 0
    %1030 = vmatpush1.bf16.msra.mxu0 %v992
    %1031 = vmatprep.subr.bf16.mxu0 0
    %1032 = vmatpush1.bf16.msra.mxu0 %v993
    %1033 = vmatprep.subr.bf16.mxu0 0
    %1034 = vmatpush1.bf16.msra.mxu0 %v994
    %1035 = vmatprep.subr.bf16.mxu0 0
    %1036 = vmatpush1.bf16.msra.mxu0 %v995
    %1037 = vmatprep.subr.bf16.mxu0 0
    %1038 = vmatpush1.bf16.msra.mxu0 %v996
    %1039 = vmatprep.subr.bf16.mxu0 0
    %1040 = vmatpush1.bf16.msra.mxu0 %v997
    %1041 = vmatprep.subr.bf16.mxu0 0
    %1042 = vmatpush1.bf16.msra.mxu0 %v998
    %1043 = vmatprep.subr.bf16.mxu0 0
    %1044 = vmatpush1.bf16.msra.mxu0 %v999
    %1045 = vmatprep.subr.bf16.mxu0 0
    %1046 = vmatpush1.bf16.msra.mxu0 %v1000
    %1047 = vmatprep.subr.bf16.mxu0 0
    %1048 = vmatpush1.bf16.msra.mxu0 %v1001
    %1049 = vmatprep.subr.bf16.mxu0 0
    %1050 = vmatpush1.bf16.msra.mxu0 %v1002
    %1051 = vmatprep.mubr.bf16.mxu0 %v883
    %1052 = vmatmul.mubr.bf16.gmra.mrb[0].mxu0 %v882
    %v1053 = vpop.f32.mrb[0].mxu0
    %v1054 = vadd.f32 %v921, %v1053
    %v1055 = vpop.f32.mrb[0].mxu0
    %v1056 = vpop.f32.mrb[0].mxu0
    %v1057 = vpop.f32.mrb[0].mxu0
    %1058 = vdwg.mxu0
    %1059 = vst [vmem:[#allocation7] sm:$0xff] %v1054
    // Predicated region
    $region38: #{tpu_custom_call.1} parent=1 // pred_check
      _
    $region39: #{tpu_custom_call.1} parent=1 // pred_check_branch
      %1061 = sbr.rel (0) target = $region41
    $region40: #{tpu_custom_call.1} parent=1 // pred_region
      %s1063 = ssub.s32 128, 128
      %1064 = vsyncadd [#allocation4], %s1063
      %s1066 = sshll.u32 [#allocation7], 4
      %s1067 = int_to_ptr.vmem [resolvable:$true] %s1066
      %1069 = dma.vmem_to_hbm [thread:$0]  %s1067, 128, %s7, [#allocation4]
    $region41: #{tpu_custom_call.1} parent=1 // pred_fallthru
      _
    // Predicated region
    $region42: #{tpu_custom_call.1} parent=1 // pred_check
      _
    $region43: #{tpu_custom_call.1} parent=1 // pred_check_branch
      %1071 = sbr.rel (0) target = $region45
    $region44: #{tpu_custom_call.1} parent=1 // pred_region
      %1072 = dma.done [#allocation4], 128
    $region45: #{tpu_custom_call.1} parent=1 // pred_fallthru
      _
    %1073 = vsyncpa [#allocation3], 1
    %1074 = vsyncpa [#allocation6], 1
    %1075 = vsyncpa [#allocation4], 1

// kernel: tpu_custom_call.1
$region0: #{tpu_custom_call.1}
  #allocation0 [shape = 'u32[]', space=smem, size = 0x4, offset = 0x4, fixed_abs, tag = 'smem constant byte address 0x4 - core index']
  #allocation1 [shape = 'u32[144,128]{1,0:T(1,128)}', space=vmem, size = 0x12000, scoped, tag = 'internal scratch']
  %s0 = inlined_call_operand.vmem [shape: f32[8,4], index: 0, kind: input, shape index: {}]
  %s1 = inlined_call_operand.vmem [shape: bf16[4,640], index: 1, kind: input, shape index: {}]
  %s2 = inlined_call_operand.vmem [shape: f32[1,640], index: 2, kind: input, shape index: {}]
  %s3 = inlined_call_operand.hbm [shape: bf16[640,256], index: 3, kind: input, shape index: {}]
  %s4 = inlined_call_operand.vmem [shape: f32[1,256], index: 4, kind: input, shape index: {}]
  %s5 = inlined_call_operand.hbm [shape: bf16[256,128], index: 5, kind: input, shape index: {}]
  %s6 = inlined_call_operand.vmem [shape: f32[1,128], index: 6, kind: input, shape index: {}]
  %s7 = inlined_call_operand.hbm [shape: f32[8,128], index: 7, kind: output, shape index: {}]
  %s8 = sld [smem:[#allocation0]]
  $region46: #{tpu_custom_call.1} parent=0
    _
  %s10 = ssub.s32 1, %s8
  %s11 = scalar_select 0, %s10, %s8
  $region1: #{tpu_custom_call.1} parent=0
    #allocation2 [shape = 'u8[327680]{0}', space=vmem, size = 0x50000, scoped, tag = 'input window, operand 3, single buffered']
    #allocation3 [shape = 's32[1]{0}', space=sflag, size = 0x4, scoped, tag = 'scoped memory for tpu_custom_call.1']
    #allocation4 [shape = 's32[1]{0}', space=sflag, size = 0x4, scoped, tag = 'scoped memory for tpu_custom_call.1']
    #allocation5 [shape = 'u8[65536]{0}', space=vmem, size = 0x10000, scoped, tag = 'input window, operand 5, single buffered']
    #allocation6 [shape = 's32[1]{0}', space=sflag, size = 0x4, scoped, tag = 'scoped memory for tpu_custom_call.1']
    #allocation7 [shape = 'u8[4096]{0}', space=vmem, size = 0x1000, scoped, tag = 'output window, operand 0, single buffered']
    %12 = vsyncpa [#allocation3], 0
    %13 = vsyncpa [#allocation6], 0
    %14 = vsyncpa [#allocation4], 0
    // Predicated region
    $region2: #{tpu_custom_call.1} parent=1 // pred_check
      _
    $region3: #{tpu_custom_call.1} parent=1 // pred_check_branch
      %16 = sbr.rel (0) target = $region5
    $region4: #{tpu_custom_call.1} parent=1 // pred_region
      _
    $region5: #{tpu_custom_call.1} parent=1 // pred_fallthru
      _
    // Predicated region
    $region6: #{tpu_custom_call.1} parent=1 // pred_check
      _
    $region7: #{tpu_custom_call.1} parent=1 // pred_check_branch
      %18 = sbr.rel (0) target = $region9
    $region8: #{tpu_custom_call.1} parent=1 // pred_region
      _
    $region9: #{tpu_custom_call.1} parent=1 // pred_fallthru
      _
    // Predicated region
    $region10: #{tpu_custom_call.1} parent=1 // pred_check
      _
    $region11: #{tpu_custom_call.1} parent=1 // pred_check_branch
      %20 = sbr.rel (0) target = $region13
    $region12: #{tpu_custom_call.1} parent=1 // pred_region
      _
    $region13: #{tpu_custom_call.1} parent=1 // pred_fallthru
      _
    // Predicated region
    $region14: #{tpu_custom_call.1} parent=1 // pred_check
      _
    $region15: #{tpu_custom_call.1} parent=1 // pred_check_branch
      %22 = sbr.rel (0) target = $region17
    $region16: #{tpu_custom_call.1} parent=1 // pred_region
      %s24 = ssub.s32 10240, 10240
      %25 = vsyncadd [#allocation3], %s24
      %s26 = sshll.u32 [#allocation2], 4
      %s27 = int_to_ptr.vmem [resolvable:$true] %s26
      %32 = dma.hbm_to_vmem [thread:$0]  %s3, 10240, %s27, [#allocation3], 128, 128, 8
    $region17: #{tpu_custom_call.1} parent=1 // pred_fallthru
      _
    // Predicated region
    $region18: #{tpu_custom_call.1} parent=1 // pred_check
      _
    $region19: #{tpu_custom_call.1} parent=1 // pred_check_branch
      %34 = sbr.rel (0) target = $region21
    $region20: #{tpu_custom_call.1} parent=1 // pred_region
      _
    $region21: #{tpu_custom_call.1} parent=1 // pred_fallthru
      _
    // Predicated region
    $region22: #{tpu_custom_call.1} parent=1 // pred_check
      _
    $region23: #{tpu_custom_call.1} parent=1 // pred_check_branch
      %36 = sbr.rel (0) target = $region25
    $region24: #{tpu_custom_call.1} parent=1 // pred_region
      %s38 = ssub.s32 2048, 2048
      %39 = vsyncadd [#allocation6], %s38
      %s40 = sshll.u32 [#allocation5], 4
      %s41 = int_to_ptr.vmem [resolvable:$true] %s40
      %46 = dma.hbm_to_vmem [thread:$0]  %s5, 2048, %s41, [#allocation6], 64, 64, 4
    $region25: #{tpu_custom_call.1} parent=1 // pred_fallthru
      _
    // Predicated region
    $region26: #{tpu_custom_call.1} parent=1 // pred_check
      _
    $region27: #{tpu_custom_call.1} parent=1 // pred_check_branch
      %48 = sbr.rel (0) target = $region29
    $region28: #{tpu_custom_call.1} parent=1 // pred_region
      _
    $region29: #{tpu_custom_call.1} parent=1 // pred_fallthru
      _
    // Predicated region
    $region30: #{tpu_custom_call.1} parent=1 // pred_check
      _
    $region31: #{tpu_custom_call.1} parent=1 // pred_check_branch
      %50 = sbr.rel (0) target = $region33
    $region32: #{tpu_custom_call.1} parent=1 // pred_region
      %51 = dma.done [#allocation3], 10240
    $region33: #{tpu_custom_call.1} parent=1 // pred_fallthru
      _
    // Predicated region
    $region34: #{tpu_custom_call.1} parent=1 // pred_check
      _
    $region35: #{tpu_custom_call.1} parent=1 // pred_check_branch
      %53 = sbr.rel (0) target = $region37
    $region36: #{tpu_custom_call.1} parent=1 // pred_region
      %54 = dma.done [#allocation6], 2048
    $region37: #{tpu_custom_call.1} parent=1 // pred_fallthru
      _
    %v56 = vld [vmem:[%s0] sm:$0xff]
    %v57 = vpack.c.bf16 %v56, %v56
    %v58 = vld [vmem:[%s1] sm:$0xff]
    %v59 = vld [vmem:[%s1 + $0x8] sm:$0x3]
    %v60 = vld [vmem:[%s2] sm:$0x1f]
    %v62 = vlaneseq
    %v63 = vshrl.u32 %v62, 7
    %v64 = vsub.s32 0, %v63
    %v65 = vrot.slane %v60, %v64
    %v66 = vlaneseq
    %v67 = vshrl.u32 %v66, 7
    %v68 = vsub.s32 1, %v67
    %v69 = vrot.slane %v60, %v68
    %v70 = vlaneseq
    %v71 = vshrl.u32 %v70, 7
    %v72 = vsub.s32 2, %v71
    %v73 = vrot.slane %v60, %v72
    %v74 = vlaneseq
    %v75 = vshrl.u32 %v74, 7
    %v76 = vsub.s32 3, %v75
    %v77 = vrot.slane %v60, %v76
    %v78 = vlaneseq
    %v79 = vshrl.u32 %v78, 7
    %v80 = vsub.s32 4, %v79
    %v81 = vrot.slane %v60, %v80
    %v89 = vcombine.high %v58, %v58
    %v91 = vunpack.c.l.s4 1983009808
    %v92 = vunpack.c.0.s8 %v91
    %v93 = vlaneseq
    %v94 = vshrl.u32 %v93, 7
    %v95 = vsub.s32 %v92, %v94
    %v96 = vrot.slane %v58, %v95
    %v98 = vunpack.c.l.s4 1983009808
    %v99 = vunpack.c.0.s8 %v98
    %v100 = vlaneseq
    %v101 = vshrl.u32 %v100, 7
    %v102 = vsub.s32 %v99, %v101
    %v103 = vrot.slane %v89, %v102
    %v104 = vcombine.high %v96, %v96
    %v105 = vcombine.high %v103, %v103
    %v107 = vunpack.c.l.s4 1983009808
    %v108 = vunpack.c.0.s8 %v107
    %v109 = vlaneseq
    %v110 = vshrl.u32 %v109, 7
    %v111 = vsub.s32 %v108, %v110
    %v112 = vrot.slane %v59, %v111
    %vm113 = vcmask 31744
    %v115 = vsel %vm113, %v57, 0
    %vm117 = vcmask 1041408
    %v119 = vsel %vm117, %v96, 0
    %v122 = vsel %vm117, %v104, 0
    %v125 = vsel %vm117, %v103, 0
    %v128 = vsel %vm117, %v105, 0
    %v131 = vsel %vm117, %v112, 0
    %133 = vmatprep.subr.bf16.mxu0 %v122
    %134 = vmatpush1.bf16.msra.mxu0 %v119
    %135 = vmatprep.subr.bf16.mxu0 0
    %136 = vmatpush1.bf16.msra.mxu0 0
    %137 = vmatprep.subr.bf16.mxu0 0
    %138 = vmatpush1.bf16.msra.mxu0 0
    %139 = vmatprep.subr.bf16.mxu0 0
    %140 = vmatpush1.bf16.msra.mxu0 0
    %141 = vmatprep.subr.bf16.mxu0 0
    %142 = vmatpush1.bf16.msra.mxu0 0
    %143 = vmatprep.subr.bf16.mxu0 0
    %144 = vmatpush1.bf16.msra.mxu0 0
    %145 = vmatprep.subr.bf16.mxu0 0
    %146 = vmatpush1.bf16.msra.mxu0 0
    %147 = vmatprep.subr.bf16.mxu0 0
    %148 = vmatpush1.bf16.msra.mxu0 0
    %149 = vmatprep.subr.bf16.mxu0 0
    %150 = vmatpush1.bf16.msra.mxu0 0
    %151 = vmatprep.subr.bf16.mxu0 0
    %152 = vmatpush1.bf16.msra.mxu0 0
    %153 = vmatprep.subr.bf16.mxu0 0
    %154 = vmatpush1.bf16.msra.mxu0 0
    %155 = vmatprep.subr.bf16.mxu0 0
    %156 = vmatpush1.bf16.msra.mxu0 0
    %157 = vmatprep.subr.bf16.mxu0 0
    %158 = vmatpush1.bf16.msra.mxu0 0
    %159 = vmatprep.subr.bf16.mxu0 0
    %160 = vmatpush1.bf16.msra.mxu0 0
    %161 = vmatprep.subr.bf16.mxu0 0
    %162 = vmatpush1.bf16.msra.mxu0 0
    %163 = vmatprep.subr.bf16.mxu0 0
    %164 = vmatpush1.bf16.msra.mxu0 0
    %165 = vmatprep.mubr.bf16.mxu0 0
    %166 = vmatmul.mubr.bf16.gmra.mrb[0].mxu0 %v115
    %v167 = vpop.f32.mrb[0].mxu0
    %v168 = vadd.f32 %v65, %v167
    %v169 = vpop.f32.mrb[0].mxu0
    %v170 = vadd.f32 %v69, %v169
    %v171 = vpop.f32.mrb[0].mxu0
    %v172 = vpop.f32.mrb[0].mxu0
    %173 = vdwg.mxu0
    %174 = vmatprep.subr.bf16.mxu0 %v128
    %175 = vmatpush1.bf16.msra.mxu0 %v125
    %176 = vmatprep.subr.bf16.mxu0 0
    %177 = vmatpush1.bf16.msra.mxu0 0
    %178 = vmatprep.subr.bf16.mxu0 0
    %179 = vmatpush1.bf16.msra.mxu0 0
    %180 = vmatprep.subr.bf16.mxu0 0
    %181 = vmatpush1.bf16.msra.mxu0 0
    %182 = vmatprep.subr.bf16.mxu0 0
    %183 = vmatpush1.bf16.msra.mxu0 0
    %184 = vmatprep.subr.bf16.mxu0 0
    %185 = vmatpush1.bf16.msra.mxu0 0
    %186 = vmatprep.subr.bf16.mxu0 0
    %187 = vmatpush1.bf16.msra.mxu0 0
    %188 = vmatprep.subr.bf16.mxu0 0
    %189 = vmatpush1.bf16.msra.mxu0 0
    %190 = vmatprep.subr.bf16.mxu0 0
    %191 = vmatpush1.bf16.msra.mxu0 0
    %192 = vmatprep.subr.bf16.mxu0 0
    %193 = vmatpush1.bf16.msra.mxu0 0
    %194 = vmatprep.subr.bf16.mxu0 0
    %195 = vmatpush1.bf16.msra.mxu0 0
    %196 = vmatprep.subr.bf16.mxu0 0
    %197 = vmatpush1.bf16.msra.mxu0 0
    %198 = vmatprep.subr.bf16.mxu0 0
    %199 = vmatpush1.bf16.msra.mxu0 0
    %200 = vmatprep.subr.bf16.mxu0 0
    %201 = vmatpush1.bf16.msra.mxu0 0
    %202 = vmatprep.subr.bf16.mxu0 0
    %203 = vmatpush1.bf16.msra.mxu0 0
    %204 = vmatprep.subr.bf16.mxu0 0
    %205 = vmatpush1.bf16.msra.mxu0 0
    %206 = vmatprep.mubr.bf16.mxu0 0
    %207 = vmatmul.mubr.bf16.gmra.mrb[0].mxu0 %v115
    %v208 = vpop.f32.mrb[0].mxu0
    %v209 = vadd.f32 %v73, %v208
    %v210 = vpop.f32.mrb[0].mxu0
    %v211 = vadd.f32 %v77, %v210
    %v212 = vpop.f32.mrb[0].mxu0
    %v213 = vpop.f32.mrb[0].mxu0
    %214 = vdwg.mxu0
    %215 = vmatprep.subr.bf16.mxu0 0
    %216 = vmatpush1.bf16.msra.mxu0 %v131
    %217 = vmatprep.subr.bf16.mxu0 0
    %218 = vmatpush1.bf16.msra.mxu0 0
    %219 = vmatprep.subr.bf16.mxu0 0
    %220 = vmatpush1.bf16.msra.mxu0 0
    %221 = vmatprep.subr.bf16.mxu0 0
    %222 = vmatpush1.bf16.msra.mxu0 0
    %223 = vmatprep.subr.bf16.mxu0 0
    %224 = vmatpush1.bf16.msra.mxu0 0
    %225 = vmatprep.subr.bf16.mxu0 0
    %226 = vmatpush1.bf16.msra.mxu0 0
    %227 = vmatprep.subr.bf16.mxu0 0
    %228 = vmatpush1.bf16.msra.mxu0 0
    %229 = vmatprep.subr.bf16.mxu0 0
    %230 = vmatpush1.bf16.msra.mxu0 0
    %231 = vmatprep.subr.bf16.mxu0 0
    %232 = vmatpush1.bf16.msra.mxu0 0
    %233 = vmatprep.subr.bf16.mxu0 0
    %234 = vmatpush1.bf16.msra.mxu0 0
    %235 = vmatprep.subr.bf16.mxu0 0
    %236 = vmatpush1.bf16.msra.mxu0 0
    %237 = vmatprep.subr.bf16.mxu0 0
    %238 = vmatpush1.bf16.msra.mxu0 0
    %239 = vmatprep.subr.bf16.mxu0 0
    %240 = vmatpush1.bf16.msra.mxu0 0
    %241 = vmatprep.subr.bf16.mxu0 0
    %242 = vmatpush1.bf16.msra.mxu0 0
    %243 = vmatprep.subr.bf16.mxu0 0
    %244 = vmatpush1.bf16.msra.mxu0 0
    %245 = vmatprep.subr.bf16.mxu0 0
    %246 = vmatpush1.bf16.msra.mxu0 0
    %247 = vmatprep.mubr.bf16.mxu0 0
    %248 = vmatmul.mubr.bf16.gmra.mrb[0].mxu0 %v115
    %v249 = vpop.f32.mrb[0].mxu0
    %v250 = vadd.f32 %v81, %v249
    %v251 = vpop.f32.mrb[0].mxu0
    %v252 = vpop.f32.mrb[0].mxu0
    %v253 = vpop.f32.mrb[0].mxu0
    %254 = vdwg.mxu0
    %v255 = vmax.f32 %v168, 0.0
    %v256 = vmax.f32 %v170, 0.0
    %v257 = vmax.f32 %v209, 0.0
    %v258 = vmax.f32 %v211, 0.0
    %v259 = vmax.f32 %v250, 0.0
    %v260 = vpack.c.bf16 %v255, %v255
    %v261 = vpack.c.bf16 %v256, %v256
    %v262 = vpack.c.bf16 %v257, %v257
    %v263 = vpack.c.bf16 %v258, %v258
    %v264 = vpack.c.bf16 %v259, %v259
    %v265 = vld [vmem:[#allocation2] sm:$0xff]
    %v266 = vld [vmem:[#allocation2 + $0x8] sm:$0xff]
    %v267 = vld [vmem:[#allocation2 + $0x10] sm:$0xff]
    %v268 = vld [vmem:[#allocation2 + $0x18] sm:$0xff]
    %v269 = vld [vmem:[#allocation2 + $0x20] sm:$0xff]
    %v270 = vld [vmem:[#allocation2 + $0x28] sm:$0xff]
    %v271 = vld [vmem:[#allocation2 + $0x30] sm:$0xff]
    %v272 = vld [vmem:[#allocation2 + $0x38] sm:$0xff]
    %v273 = vld [vmem:[#allocation2 + $0x40] sm:$0xff]
    %v274 = vld [vmem:[#allocation2 + $0x48] sm:$0xff]
    %v275 = vld [vmem:[#allocation2 + $0x50] sm:$0xff]
    %v276 = vld [vmem:[#allocation2 + $0x58] sm:$0xff]
    %v277 = vld [vmem:[#allocation2 + $0x60] sm:$0xff]
    %v278 = vld [vmem:[#allocation2 + $0x68] sm:$0xff]
    %v279 = vld [vmem:[#allocation2 + $0x70] sm:$0xff]
    %v280 = vld [vmem:[#allocation2 + $0x78] sm:$0xff]
    %v281 = vld [vmem:[#allocation2 + $0x80] sm:$0xff]
    %v282 = vld [vmem:[#allocation2 + $0x88] sm:$0xff]
    %v283 = vld [vmem:[#allocation2 + $0x90] sm:$0xff]
    %v284 = vld [vmem:[#allocation2 + $0x98] sm:$0xff]
    %v285 = vld [vmem:[#allocation2 + $0xa0] sm:$0xff]
    %v286 = vld [vmem:[#allocation2 + $0xa8] sm:$0xff]
    %v287 = vld [vmem:[#allocation2 + $0xb0] sm:$0xff]
    %v288 = vld [vmem:[#allocation2 + $0xb8] sm:$0xff]
    %v289 = vld [vmem:[#allocation2 + $0xc0] sm:$0xff]
    %v290 = vld [vmem:[#allocation2 + $0xc8] sm:$0xff]
    %v291 = vld [vmem:[#allocation2 + $0xd0] sm:$0xff]
    %v292 = vld [vmem:[#allocation2 + $0xd8] sm:$0xff]
    %v293 = vld [vmem:[#allocation2 + $0xe0] sm:$0xff]
    %v294 = vld [vmem:[#allocation2 + $0xe8] sm:$0xff]
    %v295 = vld [vmem:[#allocation2 + $0xf0] sm:$0xff]
    %v296 = vld [vmem:[#allocation2 + $0xf8] sm:$0xff]
    %v297 = vld [vmem:[#allocation2 + $0x100] sm:$0xff]
    %v298 = vld [vmem:[#allocation2 + $0x108] sm:$0xff]
    %v299 = vld [vmem:[#allocation2 + $0x110] sm:$0xff]
    %v300 = vld [vmem:[#allocation2 + $0x118] sm:$0xff]
    %v301 = vld [vmem:[#allocation2 + $0x120] sm:$0xff]
    %v302 = vld [vmem:[#allocation2 + $0x128] sm:$0xff]
    %v303 = vld [vmem:[#allocation2 + $0x130] sm:$0xff]
    %v304 = vld [vmem:[#allocation2 + $0x138] sm:$0xff]
    %v305 = vld [vmem:[#allocation2 + $0x140] sm:$0xff]
    %v306 = vld [vmem:[#allocation2 + $0x148] sm:$0xff]
    %v307 = vld [vmem:[#allocation2 + $0x150] sm:$0xff]
    %v308 = vld [vmem:[#allocation2 + $0x158] sm:$0xff]
    %v309 = vld [vmem:[#allocation2 + $0x160] sm:$0xff]
    %v310 = vld [vmem:[#allocation2 + $0x168] sm:$0xff]
    %v311 = vld [vmem:[#allocation2 + $0x170] sm:$0xff]
    %v312 = vld [vmem:[#allocation2 + $0x178] sm:$0xff]
    %v313 = vld [vmem:[#allocation2 + $0x180] sm:$0xff]
    %v314 = vld [vmem:[#allocation2 + $0x188] sm:$0xff]
    %v315 = vld [vmem:[#allocation2 + $0x190] sm:$0xff]
    %v316 = vld [vmem:[#allocation2 + $0x198] sm:$0xff]
    %v317 = vld [vmem:[#allocation2 + $0x1a0] sm:$0xff]
    %v318 = vld [vmem:[#allocation2 + $0x1a8] sm:$0xff]
    %v319 = vld [vmem:[#allocation2 + $0x1b0] sm:$0xff]
    %v320 = vld [vmem:[#allocation2 + $0x1b8] sm:$0xff]
    %v321 = vld [vmem:[#allocation2 + $0x1c0] sm:$0xff]
    %v322 = vld [vmem:[#allocation2 + $0x1c8] sm:$0xff]
    %v323 = vld [vmem:[#allocation2 + $0x1d0] sm:$0xff]
    %v324 = vld [vmem:[#allocation2 + $0x1d8] sm:$0xff]
    %v325 = vld [vmem:[#allocation2 + $0x1e0] sm:$0xff]
    %v326 = vld [vmem:[#allocation2 + $0x1e8] sm:$0xff]
    %v327 = vld [vmem:[#allocation2 + $0x1f0] sm:$0xff]
    %v328 = vld [vmem:[#allocation2 + $0x1f8] sm:$0xff]
    %v329 = vld [vmem:[#allocation2 + $0x200] sm:$0xff]
    %v330 = vld [vmem:[#allocation2 + $0x208] sm:$0xff]
    %v331 = vld [vmem:[#allocation2 + $0x210] sm:$0xff]
    %v332 = vld [vmem:[#allocation2 + $0x218] sm:$0xff]
    %v333 = vld [vmem:[#allocation2 + $0x220] sm:$0xff]
    %v334 = vld [vmem:[#allocation2 + $0x228] sm:$0xff]
    %v335 = vld [vmem:[#allocation2 + $0x230] sm:$0xff]
    %v336 = vld [vmem:[#allocation2 + $0x238] sm:$0xff]
    %v337 = vld [vmem:[#allocation2 + $0x240] sm:$0xff]
    %v338 = vld [vmem:[#allocation2 + $0x248] sm:$0xff]
    %v339 = vld [vmem:[#allocation2 + $0x250] sm:$0xff]
    %v340 = vld [vmem:[#allocation2 + $0x258] sm:$0xff]
    %v341 = vld [vmem:[#allocation2 + $0x260] sm:$0xff]
    %v342 = vld [vmem:[#allocation2 + $0x268] sm:$0xff]
    %v343 = vld [vmem:[#allocation2 + $0x270] sm:$0xff]
    %v344 = vld [vmem:[#allocation2 + $0x278] sm:$0xff]
    %v345 = vld [vmem:[%s4] sm:$0x3]
    %v347 = vlaneseq
    %v348 = vshrl.u32 %v347, 7
    %v349 = vsub.s32 0, %v348
    %v350 = vrot.slane %v345, %v349
    %v351 = vlaneseq
    %v352 = vshrl.u32 %v351, 7
    %v353 = vsub.s32 1, %v352
    %v354 = vrot.slane %v345, %v353
    %v437 = vunpack.c.l.b16 %v265
    %v438 = vunpack.c.h.b16 %v265
    %v439 = vunpack.c.l.b16 %v266
    %v440 = vunpack.c.h.b16 %v266
    %v441 = vunpack.c.l.b16 %v267
    %v442 = vunpack.c.h.b16 %v267
    %v443 = vunpack.c.l.b16 %v268
    %v444 = vunpack.c.h.b16 %v268
    %v445 = vunpack.c.l.b16 %v269
    %v446 = vunpack.c.h.b16 %v269
    %v447 = vunpack.c.l.b16 %v270
    %v448 = vunpack.c.h.b16 %v270
    %v449 = vunpack.c.l.b16 %v271
    %v450 = vunpack.c.h.b16 %v271
    %v451 = vunpack.c.l.b16 %v272
    %v452 = vunpack.c.h.b16 %v272
    %v453 = vunpack.c.l.b16 %v273
    %v454 = vunpack.c.h.b16 %v273
    %v455 = vunpack.c.l.b16 %v274
    %v456 = vunpack.c.h.b16 %v274
    %v457 = vunpack.c.l.b16 %v275
    %v458 = vunpack.c.h.b16 %v275
    %v459 = vunpack.c.l.b16 %v276
    %v460 = vunpack.c.h.b16 %v276
    %v461 = vunpack.c.l.b16 %v277
    %v462 = vunpack.c.h.b16 %v277
    %v463 = vunpack.c.l.b16 %v278
    %v464 = vunpack.c.h.b16 %v278
    %v465 = vunpack.c.l.b16 %v279
    %v466 = vunpack.c.h.b16 %v279
    %v467 = vunpack.c.l.b16 %v280
    %v468 = vunpack.c.h.b16 %v280
    %v469 = vunpack.c.l.b16 %v281
    %v470 = vunpack.c.h.b16 %v281
    %v471 = vunpack.c.l.b16 %v282
    %v472 = vunpack.c.h.b16 %v282
    %v473 = vunpack.c.l.b16 %v283
    %v474 = vunpack.c.h.b16 %v283
    %v475 = vunpack.c.l.b16 %v284
    %v476 = vunpack.c.h.b16 %v284
    %v477 = vunpack.c.l.b16 %v285
    %v478 = vunpack.c.h.b16 %v285
    %v479 = vunpack.c.l.b16 %v286
    %v480 = vunpack.c.h.b16 %v286
    %v481 = vunpack.c.l.b16 %v287
    %v482 = vunpack.c.h.b16 %v287
    %v483 = vunpack.c.l.b16 %v288
    %v484 = vunpack.c.h.b16 %v288
    %v485 = vunpack.c.l.b16 %v289
    %v486 = vunpack.c.h.b16 %v289
    %v487 = vunpack.c.l.b16 %v290
    %v488 = vunpack.c.h.b16 %v290
    %v489 = vunpack.c.l.b16 %v291
    %v490 = vunpack.c.h.b16 %v291
    %v491 = vunpack.c.l.b16 %v292
    %v492 = vunpack.c.h.b16 %v292
    %v493 = vunpack.c.l.b16 %v293
    %v494 = vunpack.c.h.b16 %v293
    %v495 = vunpack.c.l.b16 %v294
    %v496 = vunpack.c.h.b16 %v294
    %v497 = vunpack.c.l.b16 %v295
    %v498 = vunpack.c.h.b16 %v295
    %v499 = vunpack.c.l.b16 %v296
    %v500 = vunpack.c.h.b16 %v296
    %v501 = vunpack.c.l.b16 %v297
    %v502 = vunpack.c.h.b16 %v297
    %v503 = vunpack.c.l.b16 %v298
    %v504 = vunpack.c.h.b16 %v298
    %v505 = vunpack.c.l.b16 %v299
    %v506 = vunpack.c.h.b16 %v299
    %v507 = vunpack.c.l.b16 %v300
    %v508 = vunpack.c.h.b16 %v300
    %v509 = vunpack.c.l.b16 %v301
    %v510 = vunpack.c.h.b16 %v301
    %v511 = vunpack.c.l.b16 %v302
    %v512 = vunpack.c.h.b16 %v302
    %v513 = vunpack.c.l.b16 %v303
    %v514 = vunpack.c.h.b16 %v303
    %v515 = vunpack.c.l.b16 %v304
    %v516 = vunpack.c.h.b16 %v304
    %v517 = vunpack.c.l.b16 %v305
    %v518 = vunpack.c.h.b16 %v305
    %v519 = vunpack.c.l.b16 %v306
    %v520 = vunpack.c.h.b16 %v306
    %v521 = vunpack.c.l.b16 %v307
    %v522 = vunpack.c.h.b16 %v307
    %v523 = vunpack.c.l.b16 %v308
    %v524 = vunpack.c.h.b16 %v308
    %v525 = vunpack.c.l.b16 %v309
    %v526 = vunpack.c.h.b16 %v309
    %v527 = vunpack.c.l.b16 %v310
    %v528 = vunpack.c.h.b16 %v310
    %v529 = vunpack.c.l.b16 %v311
    %v530 = vunpack.c.h.b16 %v311
    %v531 = vunpack.c.l.b16 %v312
    %v532 = vunpack.c.h.b16 %v312
    %v533 = vunpack.c.l.b16 %v313
    %v534 = vunpack.c.h.b16 %v313
    %v535 = vunpack.c.l.b16 %v314
    %v536 = vunpack.c.h.b16 %v314
    %v537 = vunpack.c.l.b16 %v315
    %v538 = vunpack.c.h.b16 %v315
    %v539 = vunpack.c.l.b16 %v316
    %v540 = vunpack.c.h.b16 %v316
    %v541 = vunpack.c.l.b16 %v317
    %v542 = vunpack.c.h.b16 %v317
    %v543 = vunpack.c.l.b16 %v318
    %v544 = vunpack.c.h.b16 %v318
    %v545 = vunpack.c.l.b16 %v319
    %v546 = vunpack.c.h.b16 %v319
    %v547 = vunpack.c.l.b16 %v320
    %v548 = vunpack.c.h.b16 %v320
    %v549 = vunpack.c.l.b16 %v321
    %v550 = vunpack.c.h.b16 %v321
    %v551 = vunpack.c.l.b16 %v322
    %v552 = vunpack.c.h.b16 %v322
    %v553 = vunpack.c.l.b16 %v323
    %v554 = vunpack.c.h.b16 %v323
    %v555 = vunpack.c.l.b16 %v324
    %v556 = vunpack.c.h.b16 %v324
    %v557 = vunpack.c.l.b16 %v325
    %v558 = vunpack.c.h.b16 %v325
    %v559 = vunpack.c.l.b16 %v326
    %v560 = vunpack.c.h.b16 %v326
    %v561 = vunpack.c.l.b16 %v327
    %v562 = vunpack.c.h.b16 %v327
    %v563 = vunpack.c.l.b16 %v328
    %v564 = vunpack.c.h.b16 %v328
    %v565 = vunpack.c.l.b16 %v329
    %v566 = vunpack.c.h.b16 %v329
    %v567 = vunpack.c.l.b16 %v330
    %v568 = vunpack.c.h.b16 %v330
    %v569 = vunpack.c.l.b16 %v331
    %v570 = vunpack.c.h.b16 %v331
    %v571 = vunpack.c.l.b16 %v332
    %v572 = vunpack.c.h.b16 %v332
    %v573 = vunpack.c.l.b16 %v333
    %v574 = vunpack.c.h.b16 %v333
    %v575 = vunpack.c.l.b16 %v334
    %v576 = vunpack.c.h.b16 %v334
    %v577 = vunpack.c.l.b16 %v335
    %v578 = vunpack.c.h.b16 %v335
    %v579 = vunpack.c.l.b16 %v336
    %v580 = vunpack.c.h.b16 %v336
    %v581 = vunpack.c.l.b16 %v337
    %v582 = vunpack.c.h.b16 %v337
    %v583 = vunpack.c.l.b16 %v338
    %v584 = vunpack.c.h.b16 %v338
    %v585 = vunpack.c.l.b16 %v339
    %v586 = vunpack.c.h.b16 %v339
    %v587 = vunpack.c.l.b16 %v340
    %v588 = vunpack.c.h.b16 %v340
    %v589 = vunpack.c.l.b16 %v341
    %v590 = vunpack.c.h.b16 %v341
    %v591 = vunpack.c.l.b16 %v342
    %v592 = vunpack.c.h.b16 %v342
    %v593 = vunpack.c.l.b16 %v343
    %v594 = vunpack.c.h.b16 %v343
    %v595 = vunpack.c.l.b16 %v344
    %v596 = vunpack.c.h.b16 %v344
    %v597 = vpack.c.b16 %v439, %v437
    %v598 = vpack.c.b16 %v440, %v438
    %v599 = vpack.c.b16 %v443, %v441
    %v600 = vpack.c.b16 %v444, %v442
    %v601 = vpack.c.b16 %v447, %v445
    %v602 = vpack.c.b16 %v448, %v446
    %v603 = vpack.c.b16 %v451, %v449
    %v604 = vpack.c.b16 %v452, %v450
    %v605 = vpack.c.b16 %v455, %v453
    %v606 = vpack.c.b16 %v456, %v454
    %v607 = vpack.c.b16 %v459, %v457
    %v608 = vpack.c.b16 %v460, %v458
    %v609 = vpack.c.b16 %v463, %v461
    %v610 = vpack.c.b16 %v464, %v462
    %v611 = vpack.c.b16 %v467, %v465
    %v612 = vpack.c.b16 %v468, %v466
    %v613 = vpack.c.b16 %v471, %v469
    %v614 = vpack.c.b16 %v472, %v470
    %v615 = vpack.c.b16 %v475, %v473
    %v616 = vpack.c.b16 %v476, %v474
    %v617 = vpack.c.b16 %v479, %v477
    %v618 = vpack.c.b16 %v480, %v478
    %v619 = vpack.c.b16 %v483, %v481
    %v620 = vpack.c.b16 %v484, %v482
    %v621 = vpack.c.b16 %v487, %v485
    %v622 = vpack.c.b16 %v488, %v486
    %v623 = vpack.c.b16 %v491, %v489
    %v624 = vpack.c.b16 %v492, %v490
    %v625 = vpack.c.b16 %v495, %v493
    %v626 = vpack.c.b16 %v496, %v494
    %v627 = vpack.c.b16 %v499, %v497
    %v628 = vpack.c.b16 %v500, %v498
    %v629 = vpack.c.b16 %v503, %v501
    %v630 = vpack.c.b16 %v504, %v502
    %v631 = vpack.c.b16 %v507, %v505
    %v632 = vpack.c.b16 %v508, %v506
    %v633 = vpack.c.b16 %v511, %v509
    %v634 = vpack.c.b16 %v512, %v510
    %v635 = vpack.c.b16 %v515, %v513
    %v636 = vpack.c.b16 %v516, %v514
    %v637 = vpack.c.b16 %v519, %v517
    %v638 = vpack.c.b16 %v520, %v518
    %v639 = vpack.c.b16 %v523, %v521
    %v640 = vpack.c.b16 %v524, %v522
    %v641 = vpack.c.b16 %v527, %v525
    %v642 = vpack.c.b16 %v528, %v526
    %v643 = vpack.c.b16 %v531, %v529
    %v644 = vpack.c.b16 %v532, %v530
    %v645 = vpack.c.b16 %v535, %v533
    %v646 = vpack.c.b16 %v536, %v534
    %v647 = vpack.c.b16 %v539, %v537
    %v648 = vpack.c.b16 %v540, %v538
    %v649 = vpack.c.b16 %v543, %v541
    %v650 = vpack.c.b16 %v544, %v542
    %v651 = vpack.c.b16 %v547, %v545
    %v652 = vpack.c.b16 %v548, %v546
    %v653 = vpack.c.b16 %v551, %v549
    %v654 = vpack.c.b16 %v552, %v550
    %v655 = vpack.c.b16 %v555, %v553
    %v656 = vpack.c.b16 %v556, %v554
    %v657 = vpack.c.b16 %v559, %v557
    %v658 = vpack.c.b16 %v560, %v558
    %v659 = vpack.c.b16 %v563, %v561
    %v660 = vpack.c.b16 %v564, %v562
    %v661 = vpack.c.b16 %v567, %v565
    %v662 = vpack.c.b16 %v568, %v566
    %v663 = vpack.c.b16 %v571, %v569
    %v664 = vpack.c.b16 %v572, %v570
    %v665 = vpack.c.b16 %v575, %v573
    %v666 = vpack.c.b16 %v576, %v574
    %v667 = vpack.c.b16 %v579, %v577
    %v668 = vpack.c.b16 %v580, %v578
    %v669 = vpack.c.b16 %v583, %v581
    %v670 = vpack.c.b16 %v584, %v582
    %v671 = vpack.c.b16 %v587, %v585
    %v672 = vpack.c.b16 %v588, %v586
    %v673 = vpack.c.b16 %v591, %v589
    %v674 = vpack.c.b16 %v592, %v590
    %v675 = vpack.c.b16 %v595, %v593
    %v676 = vpack.c.b16 %v596, %v594
    %757 = vmatprep.subr.bf16.mxu0 %v598
    %758 = vmatpush1.bf16.msra.mxu0 %v597
    %759 = vmatprep.subr.bf16.mxu0 %v600
    %760 = vmatpush1.bf16.msra.mxu0 %v599
    %761 = vmatprep.subr.bf16.mxu0 %v602
    %762 = vmatpush1.bf16.msra.mxu0 %v601
    %763 = vmatprep.subr.bf16.mxu0 %v604
    %764 = vmatpush1.bf16.msra.mxu0 %v603
    %765 = vmatprep.subr.bf16.mxu0 %v606
    %766 = vmatpush1.bf16.msra.mxu0 %v605
    %767 = vmatprep.subr.bf16.mxu0 %v608
    %768 = vmatpush1.bf16.msra.mxu0 %v607
    %769 = vmatprep.subr.bf16.mxu0 %v610
    %770 = vmatpush1.bf16.msra.mxu0 %v609
    %771 = vmatprep.subr.bf16.mxu0 %v612
    %772 = vmatpush1.bf16.msra.mxu0 %v611
    %773 = vmatprep.subr.bf16.mxu0 %v614
    %774 = vmatpush1.bf16.msra.mxu0 %v613
    %775 = vmatprep.subr.bf16.mxu0 %v616
    %776 = vmatpush1.bf16.msra.mxu0 %v615
    %777 = vmatprep.subr.bf16.mxu0 %v618
    %778 = vmatpush1.bf16.msra.mxu0 %v617
    %779 = vmatprep.subr.bf16.mxu0 %v620
    %780 = vmatpush1.bf16.msra.mxu0 %v619
    %781 = vmatprep.subr.bf16.mxu0 %v622
    %782 = vmatpush1.bf16.msra.mxu0 %v621
    %783 = vmatprep.subr.bf16.mxu0 %v624
    %784 = vmatpush1.bf16.msra.mxu0 %v623
    %785 = vmatprep.subr.bf16.mxu0 %v626
    %786 = vmatpush1.bf16.msra.mxu0 %v625
    %787 = vmatprep.subr.bf16.mxu0 %v628
    %788 = vmatpush1.bf16.msra.mxu0 %v627
    %789 = vmatprep.mubr.bf16.mxu0 %v261
    %790 = vmatmul.mubr.bf16.gmra.mrb[0].mxu0 %v260
    %v791 = vpop.f32.mrb[0].mxu0
    %v792 = vadd.f32 %v350, %v791
    %v793 = vpop.f32.mrb[0].mxu0
    %v794 = vadd.f32 %v354, %v793
    %v795 = vpop.f32.mrb[0].mxu0
    %v796 = vpop.f32.mrb[0].mxu0
    %797 = vdwg.mxu0
    %798 = vmatprep.subr.bf16.mxu0 %v630
    %799 = vmatpush1.bf16.msra.mxu0 %v629
    %800 = vmatprep.subr.bf16.mxu0 %v632
    %801 = vmatpush1.bf16.msra.mxu0 %v631
    %802 = vmatprep.subr.bf16.mxu0 %v634
    %803 = vmatpush1.bf16.msra.mxu0 %v633
    %804 = vmatprep.subr.bf16.mxu0 %v636
    %805 = vmatpush1.bf16.msra.mxu0 %v635
    %806 = vmatprep.subr.bf16.mxu0 %v638
    %807 = vmatpush1.bf16.msra.mxu0 %v637
    %808 = vmatprep.subr.bf16.mxu0 %v640
    %809 = vmatpush1.bf16.msra.mxu0 %v639
    %810 = vmatprep.subr.bf16.mxu0 %v642
    %811 = vmatpush1.bf16.msra.mxu0 %v641
    %812 = vmatprep.subr.bf16.mxu0 %v644
    %813 = vmatpush1.bf16.msra.mxu0 %v643
    %814 = vmatprep.subr.bf16.mxu0 %v646
    %815 = vmatpush1.bf16.msra.mxu0 %v645
    %816 = vmatprep.subr.bf16.mxu0 %v648
    %817 = vmatpush1.bf16.msra.mxu0 %v647
    %818 = vmatprep.subr.bf16.mxu0 %v650
    %819 = vmatpush1.bf16.msra.mxu0 %v649
    %820 = vmatprep.subr.bf16.mxu0 %v652
    %821 = vmatpush1.bf16.msra.mxu0 %v651
    %822 = vmatprep.subr.bf16.mxu0 %v654
    %823 = vmatpush1.bf16.msra.mxu0 %v653
    %824 = vmatprep.subr.bf16.mxu0 %v656
    %825 = vmatpush1.bf16.msra.mxu0 %v655
    %826 = vmatprep.subr.bf16.mxu0 %v658
    %827 = vmatpush1.bf16.msra.mxu0 %v657
    %828 = vmatprep.subr.bf16.mxu0 %v660
    %829 = vmatpush1.bf16.msra.mxu0 %v659
    %830 = vmatprep.mubr.bf16.mxu0 %v263
    %831 = vmatmul.mubr.bf16.gmra.mrb[0].mxu0 %v262
    %v832 = vpop.f32.mrb[0].mxu0
    %v833 = vadd.f32 %v792, %v832
    %v834 = vpop.f32.mrb[0].mxu0
    %v835 = vadd.f32 %v794, %v834
    %v836 = vpop.f32.mrb[0].mxu0
    %v837 = vpop.f32.mrb[0].mxu0
    %838 = vdwg.mxu0
    %839 = vmatprep.subr.bf16.mxu0 %v662
    %840 = vmatpush1.bf16.msra.mxu0 %v661
    %841 = vmatprep.subr.bf16.mxu0 %v664
    %842 = vmatpush1.bf16.msra.mxu0 %v663
    %843 = vmatprep.subr.bf16.mxu0 %v666
    %844 = vmatpush1.bf16.msra.mxu0 %v665
    %845 = vmatprep.subr.bf16.mxu0 %v668
    %846 = vmatpush1.bf16.msra.mxu0 %v667
    %847 = vmatprep.subr.bf16.mxu0 %v670
    %848 = vmatpush1.bf16.msra.mxu0 %v669
    %849 = vmatprep.subr.bf16.mxu0 %v672
    %850 = vmatpush1.bf16.msra.mxu0 %v671
    %851 = vmatprep.subr.bf16.mxu0 %v674
    %852 = vmatpush1.bf16.msra.mxu0 %v673
    %853 = vmatprep.subr.bf16.mxu0 %v676
    %854 = vmatpush1.bf16.msra.mxu0 %v675
    %855 = vmatprep.subr.bf16.mxu0 0
    %856 = vmatpush1.bf16.msra.mxu0 0
    %857 = vmatprep.subr.bf16.mxu0 0
    %858 = vmatpush1.bf16.msra.mxu0 0
    %859 = vmatprep.subr.bf16.mxu0 0
    %860 = vmatpush1.bf16.msra.mxu0 0
    %861 = vmatprep.subr.bf16.mxu0 0
    %862 = vmatpush1.bf16.msra.mxu0 0
    %863 = vmatprep.subr.bf16.mxu0 0
    %864 = vmatpush1.bf16.msra.mxu0 0
    %865 = vmatprep.subr.bf16.mxu0 0
    %866 = vmatpush1.bf16.msra.mxu0 0
    %867 = vmatprep.subr.bf16.mxu0 0
    %868 = vmatpush1.bf16.msra.mxu0 0
    %869 = vmatprep.subr.bf16.mxu0 0
    %870 = vmatpush1.bf16.msra.mxu0 0
    %871 = vmatprep.mubr.bf16.mxu0 0
    %872 = vmatmul.mubr.bf16.gmra.mrb[0].mxu0 %v264
    %v873 = vpop.f32.mrb[0].mxu0
    %v874 = vadd.f32 %v833, %v873
    %v875 = vpop.f32.mrb[0].mxu0
    %v876 = vadd.f32 %v835, %v875
    %v877 = vpop.f32.mrb[0].mxu0
    %v878 = vpop.f32.mrb[0].mxu0
    %879 = vdwg.mxu0
    %v880 = vmax.f32 %v874, 0.0
    %v881 = vmax.f32 %v876, 0.0
    %v882 = vpack.c.bf16 %v880, %v880
    %v883 = vpack.c.bf16 %v881, %v881
    %v884 = vld [vmem:[#allocation5] sm:$0xf]
    %v885 = vld [vmem:[#allocation5 + $0x4] sm:$0xf]
    %v886 = vld [vmem:[#allocation5 + $0x8] sm:$0xf]
    %v887 = vld [vmem:[#allocation5 + $0xc] sm:$0xf]
    %v888 = vld [vmem:[#allocation5 + $0x10] sm:$0xf]
    %v889 = vld [vmem:[#allocation5 + $0x14] sm:$0xf]
    %v890 = vld [vmem:[#allocation5 + $0x18] sm:$0xf]
    %v891 = vld [vmem:[#allocation5 + $0x1c] sm:$0xf]
    %v892 = vld [vmem:[#allocation5 + $0x20] sm:$0xf]
    %v893 = vld [vmem:[#allocation5 + $0x24] sm:$0xf]
    %v894 = vld [vmem:[#allocation5 + $0x28] sm:$0xf]
    %v895 = vld [vmem:[#allocation5 + $0x2c] sm:$0xf]
    %v896 = vld [vmem:[#allocation5 + $0x30] sm:$0xf]
    %v897 = vld [vmem:[#allocation5 + $0x34] sm:$0xf]
    %v898 = vld [vmem:[#allocation5 + $0x38] sm:$0xf]
    %v899 = vld [vmem:[#allocation5 + $0x3c] sm:$0xf]
    %v900 = vld [vmem:[#allocation5 + $0x40] sm:$0xf]
    %v901 = vld [vmem:[#allocation5 + $0x44] sm:$0xf]
    %v902 = vld [vmem:[#allocation5 + $0x48] sm:$0xf]
    %v903 = vld [vmem:[#allocation5 + $0x4c] sm:$0xf]
    %v904 = vld [vmem:[#allocation5 + $0x50] sm:$0xf]
    %v905 = vld [vmem:[#allocation5 + $0x54] sm:$0xf]
    %v906 = vld [vmem:[#allocation5 + $0x58] sm:$0xf]
    %v907 = vld [vmem:[#allocation5 + $0x5c] sm:$0xf]
    %v908 = vld [vmem:[#allocation5 + $0x60] sm:$0xf]
    %v909 = vld [vmem:[#allocation5 + $0x64] sm:$0xf]
    %v910 = vld [vmem:[#allocation5 + $0x68] sm:$0xf]
    %v911 = vld [vmem:[#allocation5 + $0x6c] sm:$0xf]
    %v912 = vld [vmem:[#allocation5 + $0x70] sm:$0xf]
    %v913 = vld [vmem:[#allocation5 + $0x74] sm:$0xf]
    %v914 = vld [vmem:[#allocation5 + $0x78] sm:$0xf]
    %v915 = vld [vmem:[#allocation5 + $0x7c] sm:$0xf]
    %v916 = vld [vmem:[%s6] sm:$0x1]
    %v918 = vlaneseq
    %v919 = vshrl.u32 %v918, 7
    %v920 = vsub.s32 0, %v919
    %v921 = vrot.slane %v916, %v920
    %v955 = vunpack.c.l.b16 %v884
    %v956 = vunpack.c.l.b16 %v885
    %v957 = vunpack.c.l.b16 %v886
    %v958 = vunpack.c.l.b16 %v887
    %v959 = vunpack.c.l.b16 %v888
    %v960 = vunpack.c.l.b16 %v889
    %v961 = vunpack.c.l.b16 %v890
    %v962 = vunpack.c.l.b16 %v891
    %v963 = vunpack.c.l.b16 %v892
    %v964 = vunpack.c.l.b16 %v893
    %v965 = vunpack.c.l.b16 %v894
    %v966 = vunpack.c.l.b16 %v895
    %v967 = vunpack.c.l.b16 %v896
    %v968 = vunpack.c.l.b16 %v897
    %v969 = vunpack.c.l.b16 %v898
    %v970 = vunpack.c.l.b16 %v899
    %v971 = vunpack.c.l.b16 %v900
    %v972 = vunpack.c.l.b16 %v901
    %v973 = vunpack.c.l.b16 %v902
    %v974 = vunpack.c.l.b16 %v903
    %v975 = vunpack.c.l.b16 %v904
    %v976 = vunpack.c.l.b16 %v905
    %v977 = vunpack.c.l.b16 %v906
    %v978 = vunpack.c.l.b16 %v907
    %v979 = vunpack.c.l.b16 %v908
    %v980 = vunpack.c.l.b16 %v909
    %v981 = vunpack.c.l.b16 %v910
    %v982 = vunpack.c.l.b16 %v911
    %v983 = vunpack.c.l.b16 %v912
    %v984 = vunpack.c.l.b16 %v913
    %v985 = vunpack.c.l.b16 %v914
    %v986 = vunpack.c.l.b16 %v915
    %v987 = vpack.c.b16 %v956, %v955
    %v988 = vpack.c.b16 %v958, %v957
    %v989 = vpack.c.b16 %v960, %v959
    %v990 = vpack.c.b16 %v962, %v961
    %v991 = vpack.c.b16 %v964, %v963
    %v992 = vpack.c.b16 %v966, %v965
    %v993 = vpack.c.b16 %v968, %v967
    %v994 = vpack.c.b16 %v970, %v969
    %v995 = vpack.c.b16 %v972, %v971
    %v996 = vpack.c.b16 %v974, %v973
    %v997 = vpack.c.b16 %v976, %v975
    %v998 = vpack.c.b16 %v978, %v977
    %v999 = vpack.c.b16 %v980, %v979
    %v1000 = vpack.c.b16 %v982, %v981
    %v1001 = vpack.c.b16 %v984, %v983
    %v1002 = vpack.c.b16 %v986, %v985
    %1019 = vmatprep.subr.bf16.mxu0 0
    %1020 = vmatpush1.bf16.msra.mxu0 %v987
    %1021 = vmatprep.subr.bf16.mxu0 0
    %1022 = vmatpush1.bf16.msra.mxu0 %v988
    %1023 = vmatprep.subr.bf16.mxu0 0
    %1024 = vmatpush1.bf16.msra.mxu0 %v989
    %1025 = vmatprep.subr.bf16.mxu0 0
    %1026 = vmatpush1.bf16.msra.mxu0 %v990
    %1027 = vmatprep.subr.bf16.mxu0 0
    %1028 = vmatpush1.bf16.msra.mxu0 %v991
    %1029 = vmatprep.subr.bf16.mxu0 0
    %1030 = vmatpush1.bf16.msra.mxu0 %v992
    %1031 = vmatprep.subr.bf16.mxu0 0
    %1032 = vmatpush1.bf16.msra.mxu0 %v993
    %1033 = vmatprep.subr.bf16.mxu0 0
    %1034 = vmatpush1.bf16.msra.mxu0 %v994
    %1035 = vmatprep.subr.bf16.mxu0 0
    %1036 = vmatpush1.bf16.msra.mxu0 %v995
    %1037 = vmatprep.subr.bf16.mxu0 0
    %1038 = vmatpush1.bf16.msra.mxu0 %v996
    %1039 = vmatprep.subr.bf16.mxu0 0
    %1040 = vmatpush1.bf16.msra.mxu0 %v997
    %1041 = vmatprep.subr.bf16.mxu0 0
    %1042 = vmatpush1.bf16.msra.mxu0 %v998
    %1043 = vmatprep.subr.bf16.mxu0 0
    %1044 = vmatpush1.bf16.msra.mxu0 %v999
    %1045 = vmatprep.subr.bf16.mxu0 0
    %1046 = vmatpush1.bf16.msra.mxu0 %v1000
    %1047 = vmatprep.subr.bf16.mxu0 0
    %1048 = vmatpush1.bf16.msra.mxu0 %v1001
    %1049 = vmatprep.subr.bf16.mxu0 0
    %1050 = vmatpush1.bf16.msra.mxu0 %v1002
    %1051 = vmatprep.mubr.bf16.mxu0 %v883
    %1052 = vmatmul.mubr.bf16.gmra.mrb[0].mxu0 %v882
    %v1053 = vpop.f32.mrb[0].mxu0
    %v1054 = vadd.f32 %v921, %v1053
    %v1055 = vpop.f32.mrb[0].mxu0
    %v1056 = vpop.f32.mrb[0].mxu0
    %v1057 = vpop.f32.mrb[0].mxu0
    %1058 = vdwg.mxu0
    %1059 = vst [vmem:[#allocation7] sm:$0xff] %v1054
    // Predicated region
    $region38: #{tpu_custom_call.1} parent=1 // pred_check
      _
    $region39: #{tpu_custom_call.1} parent=1 // pred_check_branch
      %1061 = sbr.rel (0) target = $region41
    $region40: #{tpu_custom_call.1} parent=1 // pred_region
      %s1063 = ssub.s32 128, 128
      %1064 = vsyncadd [#allocation4], %s1063
      %s1066 = sshll.u32 [#allocation7], 4
      %s1067 = int_to_ptr.vmem [resolvable:$true] %s1066
      %1069 = dma.vmem_to_hbm [thread:$0]  %s1067, 128, %s7, [#allocation4]
    $region41: #{tpu_custom_call.1} parent=1 // pred_fallthru
      _
    // Predicated region
    $region42: #{tpu_custom_call.1} parent=1 // pred_check
      _
    $region43: #{tpu_custom_call.1} parent=1 // pred_check_branch
      %1071 = sbr.rel (0) target = $region45
    $region44: #{tpu_custom_call.1} parent=1 // pred_region
      %1072 = dma.done [#allocation4], 128
    $region45: #{tpu_custom_call.1} parent=1 // pred_fallthru
      _
    %1073 = vsyncpa [#allocation3], 1
    %1074 = vsyncpa [#allocation6], 1
    %1075 = vsyncpa [#allocation4], 1

</llo_original>
